<compile_context>
chip_gen: v7x
topology: tpu7x:2x2x1
jax: 0.10.0
libtpu: 0.0.40
codegen_flags: <defaults>
</compile_context>

<pallas_src>
import functools

import jax
import jax.numpy as jnp
from jax.experimental import pallas as pl
from jax.experimental.pallas import tpu as pltpu


# ---------------------------------------------------------------------------
# Fused Pallas kernel: all LSTM layers + final FC
# ---------------------------------------------------------------------------
def fused_lstm_kernel(x_ref, wih_ref, whh_ref, b_ref, wfc_ref, bfc_ref,
                      out_ref, seq_scr, *, seq_len, batch, hidden):
    """One grid step == one LSTM layer.

    x_ref   : (T*Bp, H)    padded input sequence (resident, fetched once)
    wih_ref : (1, H, 4H)   this layer's W_ih^T (layer-0 zero-padded to H rows)
    whh_ref : (1, H, 4H)   this layer's W_hh^T
    b_ref   : (1, 1, 4H)   this layer's b_ih + b_hh
    wfc_ref : (H, Cp)      FC weight^T (zero-padded cols), resident
    bfc_ref : (1, Cp)      FC bias (zero-padded), resident
    out_ref : (Bp, Cp)     FC output (written only on the last layer)
    seq_scr : (T*Bp, H)    VMEM scratch; holds the running hidden sequence,
                           persists across grid steps (layers).
    """
    H = hidden
    l = pl.program_id(0)
    last = pl.num_programs(0) - 1

    # Layer 0: seed the sequence buffer with the (padded) input.
    @pl.when(l == 0)
    def _seed():
        seq_scr[...] = x_ref[...]

    wih = wih_ref[0]    # (H, 4H)
    whh = whh_ref[0]    # (H, 4H)
    bias = b_ref[0]     # (1, 4H)

    # Hoisted, non-recurrent input projection for the WHOLE sequence:
    # one big MXU matmul with M = T*Bp instead of T tiny M = Bp matmuls.
    proj = (
        jnp.dot(seq_scr[...], wih, preferred_element_type=jnp.float32) + bias
    )  # (T*Bp, 4H)

    h = jnp.zeros((batch, H), jnp.float32)
    c = jnp.zeros((batch, H), jnp.float32)

    # Serial recurrence: only h @ W_hh^T + nonlinearities remain here.
    # (static unroll; T is small)
    for t in range(seq_len):
        g = proj[t * batch:(t + 1) * batch] + jnp.dot(
            h, whh, preferred_element_type=jnp.float32)          # (Bp, 4H)
        i_g = jax.nn.sigmoid(g[:, 0 * H:1 * H])
        f_g = jax.nn.sigmoid(g[:, 1 * H:2 * H])
        g_g = jnp.tanh(g[:, 2 * H:3 * H])
        o_g = jax.nn.sigmoid(g[:, 3 * H:4 * H])
        c = f_g * c + i_g * g_g
        h = o_g * jnp.tanh(c)
        # Overwrite this layer's output in place (input row t was already
        # consumed by the hoisted projection above).
        seq_scr[pl.ds(t * batch, batch), :] = h

    # Last layer: fuse the final Linear on the last timestep's hidden state.
    @pl.when(l == last)
    def _fc():
        out_ref[...] = (
            jnp.dot(h, wfc_ref[...], preferred_element_type=jnp.float32)
            + bfc_ref[...]
        )


# ---------------------------------------------------------------------------
# Parameter packing: transpose / combine / zero-pad once, outside the kernel
# ---------------------------------------------------------------------------
def pack_params(params, hidden_size, lane=128, sublane=8):
    H = hidden_size
    wih_list, whh_list, b_list = [], [], []
    for (w_ih, w_hh, b_ih, b_hh) in params["lstm"]:
        w = w_ih.T                                   # (D_in, 4H)
        d_in = w.shape[0]
        assert d_in <= H, "layer input dim must be <= hidden_size"
        if d_in < H:                                 # zero-pad layer-0 D_in -> H
            w = jnp.pad(w, ((0, H - d_in), (0, 0)))
        wih_list.append(w)
        whh_list.append(w_hh.T)                      # (H, 4H)
        b_list.append((b_ih + b_hh).reshape(1, 4 * H))
    packed = {
        "wih": jnp.stack(wih_list),                  # (L, H, 4H)
        "whh": jnp.stack(whh_list),                  # (L, H, 4H)
        "bias": jnp.stack(b_list),                   # (L, 1, 4H)
    }
    C = params["fc_w"].shape[0]
    Cp = ((C + lane - 1) // lane) * lane             # pad FC out dim to 128 lanes
    packed["fc_w"] = jnp.pad(params["fc_w"].T, ((0, 0), (0, Cp - C)))  # (H, Cp)
    packed["fc_b"] = jnp.pad(params["fc_b"], (0, Cp - C)).reshape(1, Cp)
    return packed


# ---------------------------------------------------------------------------
# Forward wrapper
# ---------------------------------------------------------------------------
@functools.partial(jax.jit, static_argnames=("num_classes",))
def lstm_model_forward(x, packed, num_classes):
    """Matches LSTMModel.forward: x is (B, T, input_size) -> (B, num_classes)."""
    wih, whh, bias = packed["wih"], packed["whh"], packed["bias"]
    wfc, bfc = packed["fc_w"], packed["fc_b"]

    B, T, D_in = x.shape
    L, H, H4 = wih.shape
    Cp = wfc.shape[1]
    Bp = ((B + 7) // 8) * 8                          # pad batch to sublane multiple

    # batch-first -> time-major, pad batch and features with zeros.
    x_tm = jnp.transpose(x, (1, 0, 2))               # (T, B, D_in)
    x_tm = jnp.pad(x_tm, ((0, 0), (0, Bp - B), (0, H - D_in)))
    x_flat = x_tm.reshape(T * Bp, H)                 # row t*Bp + b = x[b, t, :]

    kernel = functools.partial(
        fused_lstm_kernel, seq_len=T, batch=Bp, hidden=H)

    out_padded = pl.pallas_call(
        kernel,
        out_shape=jax.ShapeDtypeStruct((Bp, Cp), jnp.float32),
        grid_spec=pltpu.PrefetchScalarGridSpec(
            num_scalar_prefetch=0,
            grid=(L,),
            in_specs=[
                pl.BlockSpec((T * Bp, H), lambda l: (0, 0)),       # x (resident)
                pl.BlockSpec((1, H, H4), lambda l: (l, 0, 0)),     # W_ih^T, per layer
                pl.BlockSpec((1, H, H4), lambda l: (l, 0, 0)),     # W_hh^T, per layer
                pl.BlockSpec((1, 1, H4), lambda l: (l, 0, 0)),     # bias,   per layer
                pl.BlockSpec((H, Cp), lambda l: (0, 0)),           # FC W^T (resident)
                pl.BlockSpec((1, Cp), lambda l: (0, 0)),           # FC b   (resident)
            ],
            out_specs=pl.BlockSpec((Bp, Cp), lambda l: (0, 0)),
            scratch_shapes=[
                pltpu.VMEM((T * Bp, H), jnp.float32),              # hidden sequence
            ],
        ),
        compiler_params=pltpu.CompilerParams(
            dimension_semantics=("arbitrary",)),                   # layers are serial
    )(x_flat, wih, whh, bias, wfc, bfc)

    return out_padded[:B, :num_classes]


# ---------------------------------------------------------------------------
# Deterministic parameter init (PyTorch-style shapes, uniform(-1/sqrt(H), +))
# ---------------------------------------------------------------------------
def init_params(key, input_size, hidden_size, num_layers, num_classes):
    bound = 1.0 / jnp.sqrt(hidden_size)
    lstm = []
    for layer in range(num_layers):
        d_in = input_size if layer == 0 else hidden_size
        key, k1, k2, k3, k4 = jax.random.split(key, 5)
        w_ih = jax.random.uniform(k1, (4 * hidden_size, d_in),
                                  jnp.float32, -bound, bound)
        w_hh = jax.random.uniform(k2, (4 * hidden_size, hidden_size),
                                  jnp.float32, -bound, bound)
        b_ih = jax.random.uniform(k3, (4 * hidden_size,), jnp.float32, -bound, bound)
        b_hh = jax.random.uniform(k4, (4 * hidden_size,), jnp.float32, -bound, bound)
        lstm.append((w_ih, w_hh, b_ih, b_hh))
    key, k5, k6 = jax.random.split(key, 3)
    fc_w = jax.random.uniform(k5, (num_classes, hidden_size),
                              jnp.float32, -bound, bound)
    fc_b = jax.random.uniform(k6, (num_classes,), jnp.float32, -bound, bound)
    return {"lstm": lstm, "fc_w": fc_w, "fc_b": fc_b}


# ---------------------------------------------------------------------------
# Pure-JAX reference (sanity check of the Pallas kernel)
# ---------------------------------------------------------------------------
def reference_forward(x, params):
    B = x.shape[0]
    H = params["lstm"][0][1].shape[1]
    seq = x
    for (w_ih, w_hh, b_ih, b_hh) in params["lstm"]:
        def step(carry, x_t):
            h, c = carry
            gates = x_t @ w_ih.T + h @ w_hh.T + b_ih + b_hh
            i = jax.nn.sigmoid(gates[:, 0 * H:1 * H])
            f = jax.nn.sigmoid(gates[:, 1 * H:2 * H])
            g = jnp.tanh(gates[:, 2 * H:3 * H])
            o = jax.nn.sigmoid(gates[:, 3 * H:4 * H])
            c = f * c + i * g
            h = o * jnp.tanh(c)
            return (h, c), h
        h0 = jnp.zeros((B, H), jnp.float32)
        c0 = jnp.zeros((B, H), jnp.float32)
        _, hs = jax.lax.scan(step, (h0, c0), jnp.transpose(seq, (1, 0, 2)))
        seq = jnp.transpose(hs, (1, 0, 2))
    return seq[:, -1, :] @ params["fc_w"].T + params["fc_b"]


# ---------------------------------------------------------------------------
if __name__ == "__main__":
    # Shapes consistent with the module:
    #   input_size=28, hidden_size=128, num_layers=10, num_classes=10
    batch, seq_len = 2, 8
    input_size, hidden_size, num_layers, num_classes = 28, 128, 10, 10

    key = jax.random.PRNGKey(0)
    key, xk = jax.random.split(key)
    x = jax.random.normal(xk, (batch, seq_len, input_size), jnp.float32)

    params = init_params(key, input_size, hidden_size, num_layers, num_classes)
    packed = pack_params(params, hidden_size)

    out = lstm_model_forward(x, packed, num_classes=num_classes)
    out = jax.block_until_ready(out)
    assert out.shape == (batch, num_classes)

    ref = reference_forward(x, params)
    assert jnp.allclose(out, ref, rtol=2e-3, atol=2e-3), "Pallas output mismatch"

    print("KERNEL_OK")
</pallas_src>

<mosaic_0001>
module attributes {stable_mosaic.version = 11 : i64} {
  func.func @fused_lstm_kernel(%arg0: i32, %arg1: memref<64x128xf32, #tpu.memory_space<vmem>>, %arg2: memref<1x128x512xf32, #tpu.memory_space<vmem>>, %arg3: memref<1x128x512xf32, #tpu.memory_space<vmem>>, %arg4: memref<1x1x512xf32, #tpu.memory_space<vmem>>, %arg5: memref<128x128xf32, #tpu.memory_space<vmem>>, %arg6: memref<1x128xf32, #tpu.memory_space<vmem>>, %arg7: memref<8x128xf32, #tpu.memory_space<vmem>>, %arg8: memref<64x128xf32, #tpu.memory_space<vmem>>) attributes {dimension_semantics = [#tpu.dimension_semantics<arbitrary>], iteration_bounds = array<i64: 10>, scalar_prefetch = 0 : i64, scratch_operands = 1 : i64, tpu.core_type = #tpu.core_type<tc>, window_params = [{pipeline_mode = #tpu.pipeline_mode<synchronous>, transform_indices = @transform_0, window_bounds = array<i64: 64, 128>}, {transform_indices = @transform_1, window_bounds = array<i64: 1, 128, 512>}, {transform_indices = @transform_2, window_bounds = array<i64: 1, 128, 512>}, {transform_indices = @transform_3, window_bounds = array<i64: 1, 1, 512>}, {pipeline_mode = #tpu.pipeline_mode<synchronous>, transform_indices = @transform_4, window_bounds = array<i64: 128, 128>}, {pipeline_mode = #tpu.pipeline_mode<synchronous>, transform_indices = @transform_5, window_bounds = array<i64: 1, 128>}, {pipeline_mode = #tpu.pipeline_mode<synchronous>, transform_indices = @transform_6, window_bounds = array<i64: 8, 128>}]} {
    %c0_i32 = arith.constant 0 : i32
    %0 = arith.cmpi eq, %arg0, %c0_i32 : i32
    %1 = arith.extui %0 : i1 to i32
    %c0_i32_0 = arith.constant 0 : i32
    %2 = arith.cmpi ne, %1, %c0_i32_0 : i32
    scf.if %2 {
      %c0_55 = arith.constant 0 : index
      %c0_56 = arith.constant 0 : index
      %250 = vector.load %arg1[%c0_55, %c0_56] : memref<64x128xf32, #tpu.memory_space<vmem>>, vector<64x128xf32>
      %c0_57 = arith.constant 0 : index
      %c0_58 = arith.constant 0 : index
      %251 = vector.load %arg8[%c0_57, %c0_58] : memref<64x128xf32, #tpu.memory_space<vmem>>, vector<64x128xf32>
      tpu.vector_store %arg8[%c0_57, %c0_58], %250 {strides = array<i32>} : memref<64x128xf32, #tpu.memory_space<vmem>>, vector<64x128xf32>,
    } else {
    }
    %c0 = arith.constant 0 : index
    %c0_1 = arith.constant 0 : index
    %c0_2 = arith.constant 0 : index
    %3 = vector.load %arg2[%c0, %c0_1, %c0_2] : memref<1x128x512xf32, #tpu.memory_space<vmem>>, vector<1x128x512xf32>
    %4 = vector.shape_cast %3 : vector<1x128x512xf32> to vector<128x512xf32>
    %c0_3 = arith.constant 0 : index
    %c0_4 = arith.constant 0 : index
    %c0_5 = arith.constant 0 : index
    %5 = vector.load %arg3[%c0_3, %c0_4, %c0_5] : memref<1x128x512xf32, #tpu.memory_space<vmem>>, vector<1x128x512xf32>
    %6 = vector.shape_cast %5 : vector<1x128x512xf32> to vector<128x512xf32>
    %c0_6 = arith.constant 0 : index
    %c0_7 = arith.constant 0 : index
    %c0_8 = arith.constant 0 : index
    %7 = vector.load %arg4[%c0_6, %c0_7, %c0_8] : memref<1x1x512xf32, #tpu.memory_space<vmem>>, vector<1x1x512xf32>
    %8 = vector.shape_cast %7 : vector<1x1x512xf32> to vector<1x512xf32>
    %c0_9 = arith.constant 0 : index
    %c0_10 = arith.constant 0 : index
    %9 = vector.load %arg8[%c0_9, %c0_10] : memref<64x128xf32, #tpu.memory_space<vmem>>, vector<64x128xf32>
    %cst = arith.constant dense<0.000000e+00> : vector<64x512xf32>
    %10 = tpu.matmul %9, %4, %cst {dimension_numbers = #tpu.dot_dimension_numbers<[1], [0], [0], [1], [0, 0, 1, 1], [], []>} : vector<64x128xf32>, vector<128x512xf32>, vector<64x512xf32> -> vector<64x512xf32>
    %11 = vector.broadcast %8 : vector<1x512xf32> to vector<64x512xf32>
    %12 = arith.addf %10, %11 : vector<64x512xf32>
    %cst_11 = arith.constant 0.000000e+00 : f32
    %13 = vector.broadcast %cst_11 : f32 to vector<8x128xf32>
    %cst_12 = arith.constant 0.000000e+00 : f32
    %14 = vector.broadcast %cst_12 : f32 to vector<8x128xf32>
    %15 = vector.extract_strided_slice %12 {offsets = [0, 0], sizes = [8, 512], strides = [1, 1]} : vector<64x512xf32> to vector<8x512xf32>
    %cst_13 = arith.constant dense<0.000000e+00> : vector<8x512xf32>
    %16 = tpu.matmul %13, %6, %cst_13 {dimension_numbers = #tpu.dot_dimension_numbers<[1], [0], [0], [1], [0, 0, 1, 1], [], []>} : vector<8x128xf32>, vector<128x512xf32>, vector<8x512xf32> -> vector<8x512xf32>
    %17 = arith.addf %15, %16 : vector<8x512xf32>
    %18 = vector.extract_strided_slice %17 {offsets = [0, 0], sizes = [8, 128], strides = [1, 1]} : vector<8x512xf32> to vector<8x128xf32>
    %19 = arith.negf %18 : vector<8x128xf32>
    %20 = math.exp %19 : vector<8x128xf32>
    %cst_14 = arith.constant 1.000000e+00 : f32
    %21 = vector.broadcast %cst_14 : f32 to vector<8x128xf32>
    %22 = arith.addf %21, %20 : vector<8x128xf32>
    %23 = arith.divf %21, %22 : vector<8x128xf32>
    %24 = vector.extract_strided_slice %17 {offsets = [0, 128], sizes = [8, 128], strides = [1, 1]} : vector<8x512xf32> to vector<8x128xf32>
    %25 = arith.negf %24 : vector<8x128xf32>
    %26 = math.exp %25 : vector<8x128xf32>
    %cst_15 = arith.constant 1.000000e+00 : f32
    %27 = vector.broadcast %cst_15 : f32 to vector<8x128xf32>
    %28 = arith.addf %27, %26 : vector<8x128xf32>
    %29 = arith.divf %27, %28 : vector<8x128xf32>
    %30 = vector.extract_strided_slice %17 {offsets = [0, 256], sizes = [8, 128], strides = [1, 1]} : vector<8x512xf32> to vector<8x128xf32>
    %31 = math.tanh %30 : vector<8x128xf32>
    %32 = vector.extract_strided_slice %17 {offsets = [0, 384], sizes = [8, 128], strides = [1, 1]} : vector<8x512xf32> to vector<8x128xf32>
    %33 = arith.negf %32 : vector<8x128xf32>
    %34 = math.exp %33 : vector<8x128xf32>
    %cst_16 = arith.constant 1.000000e+00 : f32
    %35 = vector.broadcast %cst_16 : f32 to vector<8x128xf32>
    %36 = arith.addf %35, %34 : vector<8x128xf32>
    %37 = arith.divf %35, %36 : vector<8x128xf32>
    %38 = arith.mulf %29, %14 : vector<8x128xf32>
    %39 = arith.mulf %23, %31 : vector<8x128xf32>
    %40 = arith.addf %38, %39 : vector<8x128xf32>
    %41 = math.tanh %40 : vector<8x128xf32>
    %42 = arith.mulf %37, %41 : vector<8x128xf32>
    %c0_17 = arith.constant 0 : index
    %c0_18 = arith.constant 0 : index
    %43 = vector.load %arg8[%c0_17, %c0_18] : memref<64x128xf32, #tpu.memory_space<vmem>>, vector<8x128xf32>
    tpu.vector_store %arg8[%c0_17, %c0_18], %42 {strides = array<i32>} : memref<64x128xf32, #tpu.memory_space<vmem>>, vector<8x128xf32>,
    %44 = vector.extract_strided_slice %12 {offsets = [8, 0], sizes = [8, 512], strides = [1, 1]} : vector<64x512xf32> to vector<8x512xf32>
    %cst_19 = arith.constant dense<0.000000e+00> : vector<8x512xf32>
    %45 = tpu.matmul %42, %6, %cst_19 {dimension_numbers = #tpu.dot_dimension_numbers<[1], [0], [0], [1], [0, 0, 1, 1], [], []>} : vector<8x128xf32>, vector<128x512xf32>, vector<8x512xf32> -> vector<8x512xf32>
    %46 = arith.addf %44, %45 : vector<8x512xf32>
    %47 = vector.extract_strided_slice %46 {offsets = [0, 0], sizes = [8, 128], strides = [1, 1]} : vector<8x512xf32> to vector<8x128xf32>
    %48 = arith.negf %47 : vector<8x128xf32>
    %49 = math.exp %48 : vector<8x128xf32>
    %cst_20 = arith.constant 1.000000e+00 : f32
    %50 = vector.broadcast %cst_20 : f32 to vector<8x128xf32>
    %51 = arith.addf %50, %49 : vector<8x128xf32>
    %52 = arith.divf %50, %51 : vector<8x128xf32>
    %53 = vector.extract_strided_slice %46 {offsets = [0, 128], sizes = [8, 128], strides = [1, 1]} : vector<8x512xf32> to vector<8x128xf32>
    %54 = arith.negf %53 : vector<8x128xf32>
    %55 = math.exp %54 : vector<8x128xf32>
    %cst_21 = arith.constant 1.000000e+00 : f32
    %56 = vector.broadcast %cst_21 : f32 to vector<8x128xf32>
    %57 = arith.addf %56, %55 : vector<8x128xf32>
    %58 = arith.divf %56, %57 : vector<8x128xf32>
    %59 = vector.extract_strided_slice %46 {offsets = [0, 256], sizes = [8, 128], strides = [1, 1]} : vector<8x512xf32> to vector<8x128xf32>
    %60 = math.tanh %59 : vector<8x128xf32>
    %61 = vector.extract_strided_slice %46 {offsets = [0, 384], sizes = [8, 128], strides = [1, 1]} : vector<8x512xf32> to vector<8x128xf32>
    %62 = arith.negf %61 : vector<8x128xf32>
    %63 = math.exp %62 : vector<8x128xf32>
    %cst_22 = arith.constant 1.000000e+00 : f32
    %64 = vector.broadcast %cst_22 : f32 to vector<8x128xf32>
    %65 = arith.addf %64, %63 : vector<8x128xf32>
    %66 = arith.divf %64, %65 : vector<8x128xf32>
    %67 = arith.mulf %58, %40 : vector<8x128xf32>
    %68 = arith.mulf %52, %60 : vector<8x128xf32>
    %69 = arith.addf %67, %68 : vector<8x128xf32>
    %70 = math.tanh %69 : vector<8x128xf32>
    %71 = arith.mulf %66, %70 : vector<8x128xf32>
    %c8 = arith.constant 8 : index
    %c0_23 = arith.constant 0 : index
    %72 = vector.load %arg8[%c8, %c0_23] : memref<64x128xf32, #tpu.memory_space<vmem>>, vector<8x128xf32>
    tpu.vector_store %arg8[%c8, %c0_23], %71 {strides = array<i32>} : memref<64x128xf32, #tpu.memory_space<vmem>>, vector<8x128xf32>,
    %73 = vector.extract_strided_slice %12 {offsets = [16, 0], sizes = [8, 512], strides = [1, 1]} : vector<64x512xf32> to vector<8x512xf32>
    %cst_24 = arith.constant dense<0.000000e+00> : vector<8x512xf32>
    %74 = tpu.matmul %71, %6, %cst_24 {dimension_numbers = #tpu.dot_dimension_numbers<[1], [0], [0], [1], [0, 0, 1, 1], [], []>} : vector<8x128xf32>, vector<128x512xf32>, vector<8x512xf32> -> vector<8x512xf32>
    %75 = arith.addf %73, %74 : vector<8x512xf32>
    %76 = vector.extract_strided_slice %75 {offsets = [0, 0], sizes = [8, 128], strides = [1, 1]} : vector<8x512xf32> to vector<8x128xf32>
    %77 = arith.negf %76 : vector<8x128xf32>
    %78 = math.exp %77 : vector<8x128xf32>
    %cst_25 = arith.constant 1.000000e+00 : f32
    %79 = vector.broadcast %cst_25 : f32 to vector<8x128xf32>
    %80 = arith.addf %79, %78 : vector<8x128xf32>
    %81 = arith.divf %79, %80 : vector<8x128xf32>
    %82 = vector.extract_strided_slice %75 {offsets = [0, 128], sizes = [8, 128], strides = [1, 1]} : vector<8x512xf32> to vector<8x128xf32>
    %83 = arith.negf %82 : vector<8x128xf32>
    %84 = math.exp %83 : vector<8x128xf32>
    %cst_26 = arith.constant 1.000000e+00 : f32
    %85 = vector.broadcast %cst_26 : f32 to vector<8x128xf32>
    %86 = arith.addf %85, %84 : vector<8x128xf32>
    %87 = arith.divf %85, %86 : vector<8x128xf32>
    %88 = vector.extract_strided_slice %75 {offsets = [0, 256], sizes = [8, 128], strides = [1, 1]} : vector<8x512xf32> to vector<8x128xf32>
    %89 = math.tanh %88 : vector<8x128xf32>
    %90 = vector.extract_strided_slice %75 {offsets = [0, 384], sizes = [8, 128], strides = [1, 1]} : vector<8x512xf32> to vector<8x128xf32>
    %91 = arith.negf %90 : vector<8x128xf32>
    %92 = math.exp %91 : vector<8x128xf32>
    %cst_27 = arith.constant 1.000000e+00 : f32
    %93 = vector.broadcast %cst_27 : f32 to vector<8x128xf32>
    %94 = arith.addf %93, %92 : vector<8x128xf32>
    %95 = arith.divf %93, %94 : vector<8x128xf32>
    %96 = arith.mulf %87, %69 : vector<8x128xf32>
    %97 = arith.mulf %81, %89 : vector<8x128xf32>
    %98 = arith.addf %96, %97 : vector<8x128xf32>
    %99 = math.tanh %98 : vector<8x128xf32>
    %100 = arith.mulf %95, %99 : vector<8x128xf32>
    %c16 = arith.constant 16 : index
    %c0_28 = arith.constant 0 : index
    %101 = vector.load %arg8[%c16, %c0_28] : memref<64x128xf32, #tpu.memory_space<vmem>>, vector<8x128xf32>
    tpu.vector_store %arg8[%c16, %c0_28], %100 {strides = array<i32>} : memref<64x128xf32, #tpu.memory_space<vmem>>, vector<8x128xf32>,
    %102 = vector.extract_strided_slice %12 {offsets = [24, 0], sizes = [8, 512], strides = [1, 1]} : vector<64x512xf32> to vector<8x512xf32>
    %cst_29 = arith.constant dense<0.000000e+00> : vector<8x512xf32>
    %103 = tpu.matmul %100, %6, %cst_29 {dimension_numbers = #tpu.dot_dimension_numbers<[1], [0], [0], [1], [0, 0, 1, 1], [], []>} : vector<8x128xf32>, vector<128x512xf32>, vector<8x512xf32> -> vector<8x512xf32>
    %104 = arith.addf %102, %103 : vector<8x512xf32>
    %105 = vector.extract_strided_slice %104 {offsets = [0, 0], sizes = [8, 128], strides = [1, 1]} : vector<8x512xf32> to vector<8x128xf32>
    %106 = arith.negf %105 : vector<8x128xf32>
    %107 = math.exp %106 : vector<8x128xf32>
    %cst_30 = arith.constant 1.000000e+00 : f32
    %108 = vector.broadcast %cst_30 : f32 to vector<8x128xf32>
    %109 = arith.addf %108, %107 : vector<8x128xf32>
    %110 = arith.divf %108, %109 : vector<8x128xf32>
    %111 = vector.extract_strided_slice %104 {offsets = [0, 128], sizes = [8, 128], strides = [1, 1]} : vector<8x512xf32> to vector<8x128xf32>
    %112 = arith.negf %111 : vector<8x128xf32>
    %113 = math.exp %112 : vector<8x128xf32>
    %cst_31 = arith.constant 1.000000e+00 : f32
    %114 = vector.broadcast %cst_31 : f32 to vector<8x128xf32>
    %115 = arith.addf %114, %113 : vector<8x128xf32>
    %116 = arith.divf %114, %115 : vector<8x128xf32>
    %117 = vector.extract_strided_slice %104 {offsets = [0, 256], sizes = [8, 128], strides = [1, 1]} : vector<8x512xf32> to vector<8x128xf32>
    %118 = math.tanh %117 : vector<8x128xf32>
    %119 = vector.extract_strided_slice %104 {offsets = [0, 384], sizes = [8, 128], strides = [1, 1]} : vector<8x512xf32> to vector<8x128xf32>
    %120 = arith.negf %119 : vector<8x128xf32>
    %121 = math.exp %120 : vector<8x128xf32>
    %cst_32 = arith.constant 1.000000e+00 : f32
    %122 = vector.broadcast %cst_32 : f32 to vector<8x128xf32>
    %123 = arith.addf %122, %121 : vector<8x128xf32>
    %124 = arith.divf %122, %123 : vector<8x128xf32>
    %125 = arith.mulf %116, %98 : vector<8x128xf32>
    %126 = arith.mulf %110, %118 : vector<8x128xf32>
    %127 = arith.addf %125, %126 : vector<8x128xf32>
    %128 = math.tanh %127 : vector<8x128xf32>
    %129 = arith.mulf %124, %128 : vector<8x128xf32>
    %c24 = arith.constant 24 : index
    %c0_33 = arith.constant 0 : index
    %130 = vector.load %arg8[%c24, %c0_33] : memref<64x128xf32, #tpu.memory_space<vmem>>, vector<8x128xf32>
    tpu.vector_store %arg8[%c24, %c0_33], %129 {strides = array<i32>} : memref<64x128xf32, #tpu.memory_space<vmem>>, vector<8x128xf32>,
    %131 = vector.extract_strided_slice %12 {offsets = [32, 0], sizes = [8, 512], strides = [1, 1]} : vector<64x512xf32> to vector<8x512xf32>
    %cst_34 = arith.constant dense<0.000000e+00> : vector<8x512xf32>
    %132 = tpu.matmul %129, %6, %cst_34 {dimension_numbers = #tpu.dot_dimension_numbers<[1], [0], [0], [1], [0, 0, 1, 1], [], []>} : vector<8x128xf32>, vector<128x512xf32>, vector<8x512xf32> -> vector<8x512xf32>
    %133 = arith.addf %131, %132 : vector<8x512xf32>
    %134 = vector.extract_strided_slice %133 {offsets = [0, 0], sizes = [8, 128], strides = [1, 1]} : vector<8x512xf32> to vector<8x128xf32>
    %135 = arith.negf %134 : vector<8x128xf32>
    %136 = math.exp %135 : vector<8x128xf32>
    %cst_35 = arith.constant 1.000000e+00 : f32
    %137 = vector.broadcast %cst_35 : f32 to vector<8x128xf32>
    %138 = arith.addf %137, %136 : vector<8x128xf32>
    %139 = arith.divf %137, %138 : vector<8x128xf32>
    %140 = vector.extract_strided_slice %133 {offsets = [0, 128], sizes = [8, 128], strides = [1, 1]} : vector<8x512xf32> to vector<8x128xf32>
    %141 = arith.negf %140 : vector<8x128xf32>
    %142 = math.exp %141 : vector<8x128xf32>
    %cst_36 = arith.constant 1.000000e+00 : f32
    %143 = vector.broadcast %cst_36 : f32 to vector<8x128xf32>
    %144 = arith.addf %143, %142 : vector<8x128xf32>
    %145 = arith.divf %143, %144 : vector<8x128xf32>
    %146 = vector.extract_strided_slice %133 {offsets = [0, 256], sizes = [8, 128], strides = [1, 1]} : vector<8x512xf32> to vector<8x128xf32>
    %147 = math.tanh %146 : vector<8x128xf32>
    %148 = vector.extract_strided_slice %133 {offsets = [0, 384], sizes = [8, 128], strides = [1, 1]} : vector<8x512xf32> to vector<8x128xf32>
    %149 = arith.negf %148 : vector<8x128xf32>
    %150 = math.exp %149 : vector<8x128xf32>
    %cst_37 = arith.constant 1.000000e+00 : f32
    %151 = vector.broadcast %cst_37 : f32 to vector<8x128xf32>
    %152 = arith.addf %151, %150 : vector<8x128xf32>
    %153 = arith.divf %151, %152 : vector<8x128xf32>
    %154 = arith.mulf %145, %127 : vector<8x128xf32>
    %155 = arith.mulf %139, %147 : vector<8x128xf32>
    %156 = arith.addf %154, %155 : vector<8x128xf32>
    %157 = math.tanh %156 : vector<8x128xf32>
    %158 = arith.mulf %153, %157 : vector<8x128xf32>
    %c32 = arith.constant 32 : index
    %c0_38 = arith.constant 0 : index
    %159 = vector.load %arg8[%c32, %c0_38] : memref<64x128xf32, #tpu.memory_space<vmem>>, vector<8x128xf32>
    tpu.vector_store %arg8[%c32, %c0_38], %158 {strides = array<i32>} : memref<64x128xf32, #tpu.memory_space<vmem>>, vector<8x128xf32>,
    %160 = vector.extract_strided_slice %12 {offsets = [40, 0], sizes = [8, 512], strides = [1, 1]} : vector<64x512xf32> to vector<8x512xf32>
    %cst_39 = arith.constant dense<0.000000e+00> : vector<8x512xf32>
    %161 = tpu.matmul %158, %6, %cst_39 {dimension_numbers = #tpu.dot_dimension_numbers<[1], [0], [0], [1], [0, 0, 1, 1], [], []>} : vector<8x128xf32>, vector<128x512xf32>, vector<8x512xf32> -> vector<8x512xf32>
    %162 = arith.addf %160, %161 : vector<8x512xf32>
    %163 = vector.extract_strided_slice %162 {offsets = [0, 0], sizes = [8, 128], strides = [1, 1]} : vector<8x512xf32> to vector<8x128xf32>
    %164 = arith.negf %163 : vector<8x128xf32>
    %165 = math.exp %164 : vector<8x128xf32>
    %cst_40 = arith.constant 1.000000e+00 : f32
    %166 = vector.broadcast %cst_40 : f32 to vector<8x128xf32>
    %167 = arith.addf %166, %165 : vector<8x128xf32>
    %168 = arith.divf %166, %167 : vector<8x128xf32>
    %169 = vector.extract_strided_slice %162 {offsets = [0, 128], sizes = [8, 128], strides = [1, 1]} : vector<8x512xf32> to vector<8x128xf32>
    %170 = arith.negf %169 : vector<8x128xf32>
    %171 = math.exp %170 : vector<8x128xf32>
    %cst_41 = arith.constant 1.000000e+00 : f32
    %172 = vector.broadcast %cst_41 : f32 to vector<8x128xf32>
    %173 = arith.addf %172, %171 : vector<8x128xf32>
    %174 = arith.divf %172, %173 : vector<8x128xf32>
    %175 = vector.extract_strided_slice %162 {offsets = [0, 256], sizes = [8, 128], strides = [1, 1]} : vector<8x512xf32> to vector<8x128xf32>
    %176 = math.tanh %175 : vector<8x128xf32>
    %177 = vector.extract_strided_slice %162 {offsets = [0, 384], sizes = [8, 128], strides = [1, 1]} : vector<8x512xf32> to vector<8x128xf32>
    %178 = arith.negf %177 : vector<8x128xf32>
    %179 = math.exp %178 : vector<8x128xf32>
    %cst_42 = arith.constant 1.000000e+00 : f32
    %180 = vector.broadcast %cst_42 : f32 to vector<8x128xf32>
    %181 = arith.addf %180, %179 : vector<8x128xf32>
    %182 = arith.divf %180, %181 : vector<8x128xf32>
    %183 = arith.mulf %174, %156 : vector<8x128xf32>
    %184 = arith.mulf %168, %176 : vector<8x128xf32>
    %185 = arith.addf %183, %184 : vector<8x128xf32>
    %186 = math.tanh %185 : vector<8x128xf32>
    %187 = arith.mulf %182, %186 : vector<8x128xf32>
    %c40 = arith.constant 40 : index
    %c0_43 = arith.constant 0 : index
    %188 = vector.load %arg8[%c40, %c0_43] : memref<64x128xf32, #tpu.memory_space<vmem>>, vector<8x128xf32>
    tpu.vector_store %arg8[%c40, %c0_43], %187 {strides = array<i32>} : memref<64x128xf32, #tpu.memory_space<vmem>>, vector<8x128xf32>,
    %189 = vector.extract_strided_slice %12 {offsets = [48, 0], sizes = [8, 512], strides = [1, 1]} : vector<64x512xf32> to vector<8x512xf32>
    %cst_44 = arith.constant dense<0.000000e+00> : vector<8x512xf32>
    %190 = tpu.matmul %187, %6, %cst_44 {dimension_numbers = #tpu.dot_dimension_numbers<[1], [0], [0], [1], [0, 0, 1, 1], [], []>} : vector<8x128xf32>, vector<128x512xf32>, vector<8x512xf32> -> vector<8x512xf32>
    %191 = arith.addf %189, %190 : vector<8x512xf32>
    %192 = vector.extract_strided_slice %191 {offsets = [0, 0], sizes = [8, 128], strides = [1, 1]} : vector<8x512xf32> to vector<8x128xf32>
    %193 = arith.negf %192 : vector<8x128xf32>
    %194 = math.exp %193 : vector<8x128xf32>
    %cst_45 = arith.constant 1.000000e+00 : f32
    %195 = vector.broadcast %cst_45 : f32 to vector<8x128xf32>
    %196 = arith.addf %195, %194 : vector<8x128xf32>
    %197 = arith.divf %195, %196 : vector<8x128xf32>
    %198 = vector.extract_strided_slice %191 {offsets = [0, 128], sizes = [8, 128], strides = [1, 1]} : vector<8x512xf32> to vector<8x128xf32>
    %199 = arith.negf %198 : vector<8x128xf32>
    %200 = math.exp %199 : vector<8x128xf32>
    %cst_46 = arith.constant 1.000000e+00 : f32
    %201 = vector.broadcast %cst_46 : f32 to vector<8x128xf32>
    %202 = arith.addf %201, %200 : vector<8x128xf32>
    %203 = arith.divf %201, %202 : vector<8x128xf32>
    %204 = vector.extract_strided_slice %191 {offsets = [0, 256], sizes = [8, 128], strides = [1, 1]} : vector<8x512xf32> to vector<8x128xf32>
    %205 = math.tanh %204 : vector<8x128xf32>
    %206 = vector.extract_strided_slice %191 {offsets = [0, 384], sizes = [8, 128], strides = [1, 1]} : vector<8x512xf32> to vector<8x128xf32>
    %207 = arith.negf %206 : vector<8x128xf32>
    %208 = math.exp %207 : vector<8x128xf32>
    %cst_47 = arith.constant 1.000000e+00 : f32
    %209 = vector.broadcast %cst_47 : f32 to vector<8x128xf32>
    %210 = arith.addf %209, %208 : vector<8x128xf32>
    %211 = arith.divf %209, %210 : vector<8x128xf32>
    %212 = arith.mulf %203, %185 : vector<8x128xf32>
    %213 = arith.mulf %197, %205 : vector<8x128xf32>
    %214 = arith.addf %212, %213 : vector<8x128xf32>
    %215 = math.tanh %214 : vector<8x128xf32>
    %216 = arith.mulf %211, %215 : vector<8x128xf32>
    %c48 = arith.constant 48 : index
    %c0_48 = arith.constant 0 : index
    %217 = vector.load %arg8[%c48, %c0_48] : memref<64x128xf32, #tpu.memory_space<vmem>>, vector<8x128xf32>
    tpu.vector_store %arg8[%c48, %c0_48], %216 {strides = array<i32>} : memref<64x128xf32, #tpu.memory_space<vmem>>, vector<8x128xf32>,
    %218 = vector.extract_strided_slice %12 {offsets = [56, 0], sizes = [8, 512], strides = [1, 1]} : vector<64x512xf32> to vector<8x512xf32>
    %cst_49 = arith.constant dense<0.000000e+00> : vector<8x512xf32>
    %219 = tpu.matmul %216, %6, %cst_49 {dimension_numbers = #tpu.dot_dimension_numbers<[1], [0], [0], [1], [0, 0, 1, 1], [], []>} : vector<8x128xf32>, vector<128x512xf32>, vector<8x512xf32> -> vector<8x512xf32>
    %220 = arith.addf %218, %219 : vector<8x512xf32>
    %221 = vector.extract_strided_slice %220 {offsets = [0, 0], sizes = [8, 128], strides = [1, 1]} : vector<8x512xf32> to vector<8x128xf32>
    %222 = arith.negf %221 : vector<8x128xf32>
    %223 = math.exp %222 : vector<8x128xf32>
    %cst_50 = arith.constant 1.000000e+00 : f32
    %224 = vector.broadcast %cst_50 : f32 to vector<8x128xf32>
    %225 = arith.addf %224, %223 : vector<8x128xf32>
    %226 = arith.divf %224, %225 : vector<8x128xf32>
    %227 = vector.extract_strided_slice %220 {offsets = [0, 128], sizes = [8, 128], strides = [1, 1]} : vector<8x512xf32> to vector<8x128xf32>
    %228 = arith.negf %227 : vector<8x128xf32>
    %229 = math.exp %228 : vector<8x128xf32>
    %cst_51 = arith.constant 1.000000e+00 : f32
    %230 = vector.broadcast %cst_51 : f32 to vector<8x128xf32>
    %231 = arith.addf %230, %229 : vector<8x128xf32>
    %232 = arith.divf %230, %231 : vector<8x128xf32>
    %233 = vector.extract_strided_slice %220 {offsets = [0, 256], sizes = [8, 128], strides = [1, 1]} : vector<8x512xf32> to vector<8x128xf32>
    %234 = math.tanh %233 : vector<8x128xf32>
    %235 = vector.extract_strided_slice %220 {offsets = [0, 384], sizes = [8, 128], strides = [1, 1]} : vector<8x512xf32> to vector<8x128xf32>
    %236 = arith.negf %235 : vector<8x128xf32>
    %237 = math.exp %236 : vector<8x128xf32>
    %cst_52 = arith.constant 1.000000e+00 : f32
    %238 = vector.broadcast %cst_52 : f32 to vector<8x128xf32>
    %239 = arith.addf %238, %237 : vector<8x128xf32>
    %240 = arith.divf %238, %239 : vector<8x128xf32>
    %241 = arith.mulf %232, %214 : vector<8x128xf32>
    %242 = arith.mulf %226, %234 : vector<8x128xf32>
    %243 = arith.addf %241, %242 : vector<8x128xf32>
    %244 = math.tanh %243 : vector<8x128xf32>
    %245 = arith.mulf %240, %244 : vector<8x128xf32>
    %c56 = arith.constant 56 : index
    %c0_53 = arith.constant 0 : index
    %246 = vector.load %arg8[%c56, %c0_53] : memref<64x128xf32, #tpu.memory_space<vmem>>, vector<8x128xf32>
    tpu.vector_store %arg8[%c56, %c0_53], %245 {strides = array<i32>} : memref<64x128xf32, #tpu.memory_space<vmem>>, vector<8x128xf32>,
    %c9_i32 = arith.constant 9 : i32
    %247 = arith.cmpi eq, %arg0, %c9_i32 : i32
    %248 = arith.extui %247 : i1 to i32
    %c0_i32_54 = arith.constant 0 : i32
    %249 = arith.cmpi ne, %248, %c0_i32_54 : i32
    scf.if %249 {
      %c0_55 = arith.constant 0 : index
      %c0_56 = arith.constant 0 : index
      %250 = vector.load %arg5[%c0_55, %c0_56] : memref<128x128xf32, #tpu.memory_space<vmem>>, vector<128x128xf32>
      %cst_57 = arith.constant dense<0.000000e+00> : vector<8x128xf32>
      %251 = tpu.matmul %245, %250, %cst_57 {dimension_numbers = #tpu.dot_dimension_numbers<[1], [0], [0], [1], [0, 0, 1, 1], [], []>} : vector<8x128xf32>, vector<128x128xf32>, vector<8x128xf32> -> vector<8x128xf32>
      %c0_58 = arith.constant 0 : index
      %c0_59 = arith.constant 0 : index
      %252 = vector.load %arg6[%c0_58, %c0_59] : memref<1x128xf32, #tpu.memory_space<vmem>>, vector<1x128xf32>
      %253 = vector.broadcast %252 : vector<1x128xf32> to vector<8x128xf32>
      %254 = arith.addf %251, %253 : vector<8x128xf32>
      %c0_60 = arith.constant 0 : index
      %c0_61 = arith.constant 0 : index
      %255 = vector.load %arg7[%c0_60, %c0_61] : memref<8x128xf32, #tpu.memory_space<vmem>>, vector<8x128xf32>
      tpu.vector_store %arg7[%c0_60, %c0_61], %254 {strides = array<i32>} : memref<8x128xf32, #tpu.memory_space<vmem>>, vector<8x128xf32>,
    } else {
    }
    return
  }
  func.func @transform_0(%arg0: i32) -> (i32, i32) {
    %c0_i32 = arith.constant 0 : i32
    %c0_i32_0 = arith.constant 0 : i32
    %c0_i32_1 = arith.constant 0 : i32
    return %c0_i32, %c0_i32_0 : i32, i32
  }
  func.func @transform_1(%arg0: i32) -> (i32, i32, i32) {
    %c0_i32 = arith.constant 0 : i32
    %c0_i32_0 = arith.constant 0 : i32
    %c0_i32_1 = arith.constant 0 : i32
    return %arg0, %c0_i32, %c0_i32_0 : i32, i32, i32
  }
  func.func @transform_2(%arg0: i32) -> (i32, i32, i32) {
    %c0_i32 = arith.constant 0 : i32
    %c0_i32_0 = arith.constant 0 : i32
    %c0_i32_1 = arith.constant 0 : i32
    return %arg0, %c0_i32, %c0_i32_0 : i32, i32, i32
  }
  func.func @transform_3(%arg0: i32) -> (i32, i32, i32) {
    %c0_i32 = arith.constant 0 : i32
    %c0_i32_0 = arith.constant 0 : i32
    %c0_i32_1 = arith.constant 0 : i32
    return %arg0, %c0_i32, %c0_i32_0 : i32, i32, i32
  }
  func.func @transform_4(%arg0: i32) -> (i32, i32) {
    %c0_i32 = arith.constant 0 : i32
    %c0_i32_0 = arith.constant 0 : i32
    %c0_i32_1 = arith.constant 0 : i32
    return %c0_i32, %c0_i32_0 : i32, i32
  }
  func.func @transform_5(%arg0: i32) -> (i32, i32) {
    %c0_i32 = arith.constant 0 : i32
    %c0_i32_0 = arith.constant 0 : i32
    %c0_i32_1 = arith.constant 0 : i32
    return %c0_i32, %c0_i32_0 : i32, i32
  }
  func.func @transform_6(%arg0: i32) -> (i32, i32) {
    %c0_i32 = arith.constant 0 : i32
    %c0_i32_0 = arith.constant 0 : i32
    %c0_i32_1 = arith.constant 0 : i32
    return %c0_i32, %c0_i32_0 : i32, i32
  }
}

</mosaic_0001>

<llo_original>
// kernel: lstm_model_forward.1
$region0: #{lstm_model_forward.1}
  #allocation0 [shape = 'u32[]', space=smem, size = 0x4, offset = 0x4, fixed_abs, tag = 'smem constant byte address 0x4 - core index']
  #allocation1 [shape = 'u32[144,128]{1,0:T(1,128)}', space=vmem, size = 0x12000, scoped, tag = 'internal scratch']
  #allocation2 [shape = 'f32[64,128]{1,0:T(8,128)}', space=vmem, size = 0x8000, scoped, tag = 'scratch operand']
  %s0 = inlined_call_operand.vmem [shape: f32[64,128], index: 0, kind: input, shape index: {}]
  %s1 = inlined_call_operand.hbm [shape: f32[10,128,512], index: 1, kind: input, shape index: {}]
  %s2 = inlined_call_operand.hbm [shape: f32[10,128,512], index: 2, kind: input, shape index: {}]
  %s3 = inlined_call_operand.hbm [shape: f32[10,1,512], index: 3, kind: input, shape index: {}]
  %s4 = inlined_call_operand.hbm [shape: f32[128,128], index: 4, kind: input, shape index: {}]
  %s5 = inlined_call_operand.hbm [shape: f32[1,128], index: 5, kind: input, shape index: {}]
  %s6 = inlined_call_operand.vmem [shape: f32[8,128], index: 6, kind: output, shape index: {}]
  %s7 = sld [smem:[#allocation0]]
  $region85: #{lstm_model_forward.1} parent=0
    _
  %s9 = ssub.s32 1, %s7
  %s10 = scalar_select 0, %s9, %s7
  $region1: #{lstm_model_forward.1} parent=0
    #allocation3 [shape = 'u8[524288]{0}', space=vmem, size = 0x80000, scoped, tag = 'input window, operand 1']
    #allocation4 [shape = 's32[2]{0}', space=sflag, size = 0x8, scoped, tag = 'scoped memory for lstm_model_forward.1']
    #allocation5 [shape = 'u8[524288]{0}', space=vmem, size = 0x80000, scoped, tag = 'input window, operand 2']
    #allocation6 [shape = 's32[2]{0}', space=sflag, size = 0x8, scoped, tag = 'scoped memory for lstm_model_forward.1']
    #allocation7 [shape = 'u8[4096]{0}', space=vmem, size = 0x1000, scoped, tag = 'input window, operand 3']
    #allocation8 [shape = 'u8[65536]{0}', space=vmem, size = 0x10000, scoped, tag = 'input window, operand 4, single buffered']
    #allocation9 [shape = 's32[1]{0}', space=sflag, size = 0x4, scoped, tag = 'scoped memory for lstm_model_forward.1']
    #allocation10 [shape = 'u8[512]{0}', space=vmem, size = 0x400, scoped, tag = 'input window, operand 5, single buffered']
    %11 = vsyncpa [#allocation4], 0
    %s12 = scalar_lea.sflag [#allocation4], 1
    %13 = vsyncpa %s12, 0
    %14 = vsyncpa [#allocation6], 0
    %s15 = scalar_lea.sflag [#allocation6], 1
    %16 = vsyncpa %s15, 0
    %17 = vsyncpa [#allocation9], 0
    loop: start=0, step=1, limit=12
    $region2: #{lstm_model_forward.1} parent=1 // loop_pre_header
      _
    $region3: #{lstm_model_forward.1} parent=1 // loop_header
      %s19 = sphi 0, %s23
      %p20 = scmp.ge.s32.totalorder %s19, 12
      %s27 = sphi 0, %s27
      %s29 = sphi 0, %s27
      %s30 = sphi 0, %s29
      %s44 = sphi 0, %s30
      %s50 = sphi 0, %s52
      %s53 = sphi 0, %s50
      %s54 = sphi 0, %s53
      %s70 = sphi 0, %s54
      %s76 = sphi 0, %s78
      %s79 = sphi 0, %s76
      %s80 = sphi 0, %s79
      %s96 = sphi 0, %s80
      %s102 = sphi 0, %s104
      %s105 = sphi 0, %s102
      %s106 = sphi 0, %s105
      %s122 = sphi 0, %s106
      %s126 = sphi 0, %s126
      %s128 = sphi 0, %s126
      %s129 = sphi 0, %s128
      %s143 = sphi 0, %s129
      %s147 = sphi 0, %s147
      %s149 = sphi 0, %s147
      %s150 = sphi 0, %s149
      %s164 = sphi 0, %s150
      %s168 = sphi 0, %s168
      %s170 = sphi 0, %s168
      %s171 = sphi 0, %s170
      %s185 = sphi 0, %s171
    $region4: #{lstm_model_forward.1} parent=1 // loop_header_branch
      %22 = sbr.rel (%p20) target = $region8
    $region5: #{lstm_model_forward.1} parent=1 // loop_body
      %s24 = ssub.s32 %s19, 1
      %s25 = ssub.s32 %s19, 2
      %s26 = sadd.s32 %s19, 1
      %s28 = sadd.s32 %s27, 1
      %p31 = scmp.eq.s32.totalorder %s19, 9
      %p32 = scmp.ne.s32.totalorder %s27, %s29
      %p33 = scmp.eq.s32.totalorder %s19, 0
      %p34 = por %p32, %p33
      %p35 = scmp.ne.s32.totalorder %s27, %s29
      %p36 = scmp.eq.s32.totalorder %s24, 9
      %p37 = por %p35, %p36
      %p38 = scmp.ne.s32.totalorder %s29, %s30
      %p39 = scmp.eq.s32.totalorder %s24, 0
      %p40 = por %p38, %p39
      %p41 = scmp.ne.s32.totalorder %s29, %s30
      %p42 = scmp.eq.s32.totalorder %s25, 9
      %p43 = por %p41, %p42
      %p45 = scmp.ne.s32.totalorder %s30, %s44
      %p46 = scmp.eq.s32.totalorder %s25, 0
      %p47 = por %p45, %p46
      %s48 = ssub.s32 %s19, %s26
      %p49 = scmp.eq.s32.totalorder %s48, 0
      %s51 = sadd.s32 %s50, 1
      %s52 = scalar_select %p49, %s50, %s51
      %p55 = pneg %p49
      %p56 = scmp.eq.s32.totalorder %s19, 9
      %p57 = por %p55, %p56
      %p58 = scmp.ne.s32.totalorder %s50, %s53
      %p59 = scmp.eq.s32.totalorder %s19, 0
      %p60 = por %p58, %p59
      %p61 = scmp.ne.s32.totalorder %s50, %s53
      %p62 = scmp.eq.s32.totalorder %s24, 9
      %p63 = por %p61, %p62
      %p64 = scmp.ne.s32.totalorder %s53, %s54
      %p65 = scmp.eq.s32.totalorder %s24, 0
      %p66 = por %p64, %p65
      %p67 = scmp.ne.s32.totalorder %s53, %s54
      %p68 = scmp.eq.s32.totalorder %s25, 9
      %p69 = por %p67, %p68
      %p71 = scmp.ne.s32.totalorder %s54, %s70
      %p72 = scmp.eq.s32.totalorder %s25, 0
      %p73 = por %p71, %p72
      %s74 = ssub.s32 %s19, %s26
      %p75 = scmp.eq.s32.totalorder %s74, 0
      %s77 = sadd.s32 %s76, 1
      %s78 = scalar_select %p75, %s76, %s77
      %p81 = pneg %p75
      %p82 = scmp.eq.s32.totalorder %s19, 9
      %p83 = por %p81, %p82
      %p84 = scmp.ne.s32.totalorder %s76, %s79
      %p85 = scmp.eq.s32.totalorder %s19, 0
      %p86 = por %p84, %p85
      %p87 = scmp.ne.s32.totalorder %s76, %s79
      %p88 = scmp.eq.s32.totalorder %s24, 9
      %p89 = por %p87, %p88
      %p90 = scmp.ne.s32.totalorder %s79, %s80
      %p91 = scmp.eq.s32.totalorder %s24, 0
      %p92 = por %p90, %p91
      %p93 = scmp.ne.s32.totalorder %s79, %s80
      %p94 = scmp.eq.s32.totalorder %s25, 9
      %p95 = por %p93, %p94
      %p97 = scmp.ne.s32.totalorder %s80, %s96
      %p98 = scmp.eq.s32.totalorder %s25, 0
      %p99 = por %p97, %p98
      %s100 = ssub.s32 %s19, %s26
      %p101 = scmp.eq.s32.totalorder %s100, 0
      %s103 = sadd.s32 %s102, 1
      %s104 = scalar_select %p101, %s102, %s103
      %p107 = pneg %p101
      %p108 = scmp.eq.s32.totalorder %s19, 9
      %p109 = por %p107, %p108
      %p110 = scmp.ne.s32.totalorder %s102, %s105
      %p111 = scmp.eq.s32.totalorder %s19, 0
      %p112 = por %p110, %p111
      %p113 = scmp.ne.s32.totalorder %s102, %s105
      %p114 = scmp.eq.s32.totalorder %s24, 9
      %p115 = por %p113, %p114
      %p116 = scmp.ne.s32.totalorder %s105, %s106
      %p117 = scmp.eq.s32.totalorder %s24, 0
      %p118 = por %p116, %p117
      %p119 = scmp.ne.s32.totalorder %s105, %s106
      %p120 = scmp.eq.s32.totalorder %s25, 9
      %p121 = por %p119, %p120
      %p123 = scmp.ne.s32.totalorder %s106, %s122
      %p124 = scmp.eq.s32.totalorder %s25, 0
      %p125 = por %p123, %p124
      %s127 = sadd.s32 %s126, 1
      %p130 = scmp.eq.s32.totalorder %s19, 9
      %p131 = scmp.ne.s32.totalorder %s126, %s128
      %p132 = scmp.eq.s32.totalorder %s19, 0
      %p133 = por %p131, %p132
      %p134 = scmp.ne.s32.totalorder %s126, %s128
      %p135 = scmp.eq.s32.totalorder %s24, 9
      %p136 = por %p134, %p135
      %p137 = scmp.ne.s32.totalorder %s128, %s129
      %p138 = scmp.eq.s32.totalorder %s24, 0
      %p139 = por %p137, %p138
      %p140 = scmp.ne.s32.totalorder %s128, %s129
      %p141 = scmp.eq.s32.totalorder %s25, 9
      %p142 = por %p140, %p141
      %p144 = scmp.ne.s32.totalorder %s129, %s143
      %p145 = scmp.eq.s32.totalorder %s25, 0
      %p146 = por %p144, %p145
      %s148 = sadd.s32 %s147, 1
      %p151 = scmp.eq.s32.totalorder %s19, 9
      %p152 = scmp.ne.s32.totalorder %s147, %s149
      %p153 = scmp.eq.s32.totalorder %s19, 0
      %p154 = por %p152, %p153
      %p155 = scmp.ne.s32.totalorder %s147, %s149
      %p156 = scmp.eq.s32.totalorder %s24, 9
      %p157 = por %p155, %p156
      %p158 = scmp.ne.s32.totalorder %s149, %s150
      %p159 = scmp.eq.s32.totalorder %s24, 0
      %p160 = por %p158, %p159
      %p161 = scmp.ne.s32.totalorder %s149, %s150
      %p162 = scmp.eq.s32.totalorder %s25, 9
      %p163 = por %p161, %p162
      %p165 = scmp.ne.s32.totalorder %s150, %s164
      %p166 = scmp.eq.s32.totalorder %s25, 0
      %p167 = por %p165, %p166
      %s169 = sadd.s32 %s168, 1
      %p172 = scmp.eq.s32.totalorder %s19, 9
      %p173 = scmp.ne.s32.totalorder %s168, %s170
      %p174 = scmp.eq.s32.totalorder %s19, 0
      %p175 = por %p173, %p174
      %p176 = scmp.ne.s32.totalorder %s168, %s170
      %p177 = scmp.eq.s32.totalorder %s24, 9
      %p178 = por %p176, %p177
      %p179 = scmp.ne.s32.totalorder %s170, %s171
      %p180 = scmp.eq.s32.totalorder %s24, 0
      %p181 = por %p179, %p180
      %p182 = scmp.ne.s32.totalorder %s170, %s171
      %p183 = scmp.eq.s32.totalorder %s25, 9
      %p184 = por %p182, %p183
      %p186 = scmp.ne.s32.totalorder %s171, %s185
      %p187 = scmp.eq.s32.totalorder %s25, 0
      %p188 = por %p186, %p187
      %p189 = scmp.le.s32.totalorder 1, %s19
      %p190 = scmp.lt.s32.totalorder %s19, 11
      %p191 = pnand %p189, %p190
      %p192 = pneg %p191
      // Predicated region
      $region9: #{lstm_model_forward.1} parent=5 // pred_check
        _
      $region10: #{lstm_model_forward.1} parent=5 // pred_check_branch
        %194 = sbr.rel (%p191) target = $region12
      $region11: #{lstm_model_forward.1} parent=5 // pred_region
        %s195 = ssub.s32 %s19, 1
        // Predicated region
        $region13: #{lstm_model_forward.1} parent=11 // pred_check
          %p196 = pneg %p40
        $region14: #{lstm_model_forward.1} parent=11 // pred_check_branch
          %198 = sbr.rel (%p196) target = $region16
        $region15: #{lstm_model_forward.1} parent=11 // pred_region
          _
        $region16: #{lstm_model_forward.1} parent=11 // pred_fallthru
          _
        // Predicated region
        $region17: #{lstm_model_forward.1} parent=11 // pred_check
          %p199 = pneg %p139
        $region18: #{lstm_model_forward.1} parent=11 // pred_check_branch
          %201 = sbr.rel (%p199) target = $region20
        $region19: #{lstm_model_forward.1} parent=11 // pred_region
          %s203 = ssub.s32 2048, 2048
          %204 = vsyncadd [#allocation9], %s203
          %s205 = sshll.u32 [#allocation8], 4
          %s206 = int_to_ptr.vmem [resolvable:$true] %s205
          %211 = dma.hbm_to_vmem [thread:$0]  %s4, 2048, %s206, [#allocation9], 128, 128, 8
        $region20: #{lstm_model_forward.1} parent=11 // pred_fallthru
          _
        // Predicated region
        $region21: #{lstm_model_forward.1} parent=11 // pred_check
          %p212 = pneg %p160
        $region22: #{lstm_model_forward.1} parent=11 // pred_check_branch
          %214 = sbr.rel (%p212) target = $region24
        $region23: #{lstm_model_forward.1} parent=11 // pred_region
          %s216 = ssub.s32 16, 16
          %217 = vsyncadd [#allocation9], %s216
          %s219 = sshll.u32 [#allocation10], 4
          %s220 = int_to_ptr.vmem [resolvable:$true] %s219
          %222 = dma.hbm_to_vmem [thread:$0]  %s5, 16, %s220, [#allocation9]
        $region24: #{lstm_model_forward.1} parent=11 // pred_fallthru
          _
      $region12: #{lstm_model_forward.1} parent=5 // pred_fallthru
        _
      %p223 = scmp.lt.s32.totalorder %s19, 10
      // Predicated region
      $region25: #{lstm_model_forward.1} parent=5 // pred_check
        %p224 = pneg %p223
      $region26: #{lstm_model_forward.1} parent=5 // pred_check_branch
        %226 = sbr.rel (%p224) target = $region28
      $region27: #{lstm_model_forward.1} parent=5 // pred_region
        // Predicated region
        $region29: #{lstm_model_forward.1} parent=27 // pred_check
          %p227 = pneg %p60
        $region30: #{lstm_model_forward.1} parent=27 // pred_check_branch
          %229 = sbr.rel (%p227) target = $region32
        $region31: #{lstm_model_forward.1} parent=27 // pred_region
          %s230 = sand.u32 %s50, 1
          %s231 = scalar_lea.sflag [#allocation4], %s230
          %s232 = sand.u32 %s50, 1
          %s233 = smul.addr %s232, 512
          %s234 = scalar_lea.vmem [#allocation3], %s233
          %s236 = ssub.s32 8192, 8192
          %237 = vsyncadd %s231, %s236
          %s238 = smul.addr %s19, 64
          %s239 = smul.addr %s238, 128
          %s240 = scalar_lea.hbm %s1, %s239
          %s241 = sshll.u32 %s234, 4
          %s242 = int_to_ptr.vmem [resolvable:$true] %s241
          %247 = dma.hbm_to_vmem [thread:$0]  %s240, 8192, %s242, %s231, 512, 512, 32
        $region32: #{lstm_model_forward.1} parent=27 // pred_fallthru
          _
        // Predicated region
        $region33: #{lstm_model_forward.1} parent=27 // pred_check
          %p248 = pneg %p86
        $region34: #{lstm_model_forward.1} parent=27 // pred_check_branch
          %250 = sbr.rel (%p248) target = $region36
        $region35: #{lstm_model_forward.1} parent=27 // pred_region
          %s251 = sand.u32 %s19, 1
          %s252 = scalar_lea.sflag [#allocation6], %s251
          %s253 = sand.u32 %s76, 1
          %s254 = smul.addr %s253, 512
          %s255 = scalar_lea.vmem [#allocation5], %s254
          %s257 = ssub.s32 8192, 8192
          %258 = vsyncadd %s252, %s257
          %s259 = smul.addr %s19, 64
          %s260 = smul.addr %s259, 128
          %s261 = scalar_lea.hbm %s2, %s260
          %s262 = sshll.u32 %s255, 4
          %s263 = int_to_ptr.vmem [resolvable:$true] %s262
          %268 = dma.hbm_to_vmem [thread:$0]  %s261, 8192, %s263, %s252, 512, 512, 32
        $region36: #{lstm_model_forward.1} parent=27 // pred_fallthru
          _
        // Predicated region
        $region37: #{lstm_model_forward.1} parent=27 // pred_check
          %p269 = pneg %p112
        $region38: #{lstm_model_forward.1} parent=27 // pred_check_branch
          %271 = sbr.rel (%p269) target = $region40
        $region39: #{lstm_model_forward.1} parent=27 // pred_region
          %s272 = sand.u32 %s19, 1
          %s273 = scalar_lea.sflag [#allocation6], %s272
          %s274 = sand.u32 %s102, 1
          %s275 = smul.addr %s274, 4
          %s276 = scalar_lea.vmem [#allocation7], %s275
          %s278 = ssub.s32 64, 64
          %279 = vsyncadd %s273, %s278
          %s280 = smul.addr %s19, 4
          %s281 = smul.addr %s280, 16
          %s282 = scalar_lea.hbm %s3, %s281
          %s284 = sshll.u32 %s276, 4
          %s285 = int_to_ptr.vmem [resolvable:$true] %s284
          %287 = dma.hbm_to_vmem [thread:$0]  %s282, 64, %s285, %s273
        $region40: #{lstm_model_forward.1} parent=27 // pred_fallthru
          _
      $region28: #{lstm_model_forward.1} parent=5 // pred_fallthru
        _
      %p288 = scmp.le.s32.totalorder 1, %s19
      %p289 = scmp.lt.s32.totalorder %s19, 11
      %p290 = pnand %p288, %p289
      %p291 = pneg %p290
      // Predicated region
      $region41: #{lstm_model_forward.1} parent=5 // pred_check
        _
      $region42: #{lstm_model_forward.1} parent=5 // pred_check_branch
        %293 = sbr.rel (%p290) target = $region44
      $region43: #{lstm_model_forward.1} parent=5 // pred_region
        %s294 = ssub.s32 %s19, 1
        %s295 = sand.u32 %s53, 1
        %s296 = scalar_lea.sflag [#allocation4], %s295
        %s297 = sand.u32 %s53, 1
        %s298 = smul.addr %s297, 512
        %s299 = scalar_lea.vmem [#allocation3], %s298
        // Predicated region
        $region45: #{lstm_model_forward.1} parent=43 // pred_check
          %p300 = pneg %p66
        $region46: #{lstm_model_forward.1} parent=43 // pred_check_branch
          %302 = sbr.rel (%p300) target = $region48
        $region47: #{lstm_model_forward.1} parent=43 // pred_region
          %303 = dma.done %s296, 8192
        $region48: #{lstm_model_forward.1} parent=43 // pred_fallthru
          _
        %s304 = sand.u32 %s24, 1
        %s305 = scalar_lea.sflag [#allocation6], %s304
        %s306 = sand.u32 %s79, 1
        %s307 = smul.addr %s306, 512
        %s308 = scalar_lea.vmem [#allocation5], %s307
        // Predicated region
        $region49: #{lstm_model_forward.1} parent=43 // pred_check
          %p309 = pneg %p92
        $region50: #{lstm_model_forward.1} parent=43 // pred_check_branch
          %311 = sbr.rel (%p309) target = $region52
        $region51: #{lstm_model_forward.1} parent=43 // pred_region
          %312 = dma.done %s305, 8192
        $region52: #{lstm_model_forward.1} parent=43 // pred_fallthru
          _
        %s313 = sand.u32 %s24, 1
        %s314 = scalar_lea.sflag [#allocation6], %s313
        %s315 = sand.u32 %s105, 1
        %s316 = smul.addr %s315, 4
        %s317 = scalar_lea.vmem [#allocation7], %s316
        // Predicated region
        $region53: #{lstm_model_forward.1} parent=43 // pred_check
          %p318 = pneg %p118
        $region54: #{lstm_model_forward.1} parent=43 // pred_check_branch
          %320 = sbr.rel (%p318) target = $region56
        $region55: #{lstm_model_forward.1} parent=43 // pred_region
          %321 = dma.done %s314, 64
        $region56: #{lstm_model_forward.1} parent=43 // pred_fallthru
          _
        // Predicated region
        $region57: #{lstm_model_forward.1} parent=43 // pred_check
          %p322 = pneg %p139
        $region58: #{lstm_model_forward.1} parent=43 // pred_check_branch
          %324 = sbr.rel (%p322) target = $region60
        $region59: #{lstm_model_forward.1} parent=43 // pred_region
          %325 = dma.done [#allocation9], 2048
        $region60: #{lstm_model_forward.1} parent=43 // pred_fallthru
          _
        // Predicated region
        $region61: #{lstm_model_forward.1} parent=43 // pred_check
          %p326 = pneg %p160
        $region62: #{lstm_model_forward.1} parent=43 // pred_check_branch
          %328 = sbr.rel (%p326) target = $region64
        $region63: #{lstm_model_forward.1} parent=43 // pred_region
          %329 = dma.done [#allocation9], 16
        $region64: #{lstm_model_forward.1} parent=43 // pred_fallthru
          _
        %p330 = pneg %p40
        %p331 = pneg %p37
        %s332 = sand.u32 %s53, 1
        %s333 = scalar_lea.sflag [#allocation4], %s332
        %s334 = sand.u32 %s53, 1
        %s335 = smul.addr %s334, 512
        %s336 = scalar_lea.vmem [#allocation3], %s335
        %p337 = pneg %p66
        %p338 = pneg %p63
        %s339 = sand.u32 %s24, 1
        %s340 = scalar_lea.sflag [#allocation6], %s339
        %s341 = sand.u32 %s79, 1
        %s342 = smul.addr %s341, 512
        %s343 = scalar_lea.vmem [#allocation5], %s342
        %p344 = pneg %p92
        %p345 = pneg %p89
        %s346 = sand.u32 %s24, 1
        %s347 = scalar_lea.sflag [#allocation6], %s346
        %s348 = sand.u32 %s105, 1
        %s349 = smul.addr %s348, 4
        %s350 = scalar_lea.vmem [#allocation7], %s349
        %p351 = pneg %p118
        %p352 = pneg %p115
        %p353 = pneg %p139
        %p354 = pneg %p136
        %p355 = pneg %p160
        %p356 = pneg %p157
        %p357 = pneg %p181
        %p358 = pneg %p178
        %p359 = scmp.eq.s32.totalorder %s24, 0
        // Predicated region
        $region65: #{lstm_model_forward.1} parent=43 // pred_check
          %p360 = pneg %p359
        $region66: #{lstm_model_forward.1} parent=43 // pred_check_branch
          %362 = sbr.rel (%p360) target = $region68
        $region67: #{lstm_model_forward.1} parent=43 // pred_region
          %v363 = vld [vmem:[%s0] sm:$0xff]
          %v364 = vld [vmem:[%s0 + $0x8] sm:$0xff]
          %v365 = vld [vmem:[%s0 + $0x10] sm:$0xff]
          %v366 = vld [vmem:[%s0 + $0x18] sm:$0xff]
          %v367 = vld [vmem:[%s0 + $0x20] sm:$0xff]
          %v368 = vld [vmem:[%s0 + $0x28] sm:$0xff]
          %v369 = vld [vmem:[%s0 + $0x30] sm:$0xff]
          %v370 = vld [vmem:[%s0 + $0x38] sm:$0xff]
          %371 = vst [vmem:[#allocation2] sm:$0xff] %v363
          %372 = vst [vmem:[#allocation2 + $0x8] sm:$0xff] %v364
          %373 = vst [vmem:[#allocation2 + $0x10] sm:$0xff] %v365
          %374 = vst [vmem:[#allocation2 + $0x18] sm:$0xff] %v366
          %375 = vst [vmem:[#allocation2 + $0x20] sm:$0xff] %v367
          %376 = vst [vmem:[#allocation2 + $0x28] sm:$0xff] %v368
          %377 = vst [vmem:[#allocation2 + $0x30] sm:$0xff] %v369
          %378 = vst [vmem:[#allocation2 + $0x38] sm:$0xff] %v370
        $region68: #{lstm_model_forward.1} parent=43 // pred_fallthru
          _
        %v379 = vld [vmem:[%s299] sm:$0xff]
        %v380 = vld [vmem:[%s299 + $0x8] sm:$0xff]
        %v381 = vld [vmem:[%s299 + $0x10] sm:$0xff]
        %v382 = vld [vmem:[%s299 + $0x18] sm:$0xff]
        %v383 = vld [vmem:[%s299 + $0x20] sm:$0xff]
        %v384 = vld [vmem:[%s299 + $0x28] sm:$0xff]
        %v385 = vld [vmem:[%s299 + $0x30] sm:$0xff]
        %v386 = vld [vmem:[%s299 + $0x38] sm:$0xff]
        %v387 = vld [vmem:[%s299 + $0x40] sm:$0xff]
        %v388 = vld [vmem:[%s299 + $0x48] sm:$0xff]
        %v389 = vld [vmem:[%s299 + $0x50] sm:$0xff]
        %v390 = vld [vmem:[%s299 + $0x58] sm:$0xff]
        %v391 = vld [vmem:[%s299 + $0x60] sm:$0xff]
        %v392 = vld [vmem:[%s299 + $0x68] sm:$0xff]
        %v393 = vld [vmem:[%s299 + $0x70] sm:$0xff]
        %v394 = vld [vmem:[%s299 + $0x78] sm:$0xff]
        %v395 = vld [vmem:[%s299 + $0x80] sm:$0xff]
        %v396 = vld [vmem:[%s299 + $0x88] sm:$0xff]
        %v397 = vld [vmem:[%s299 + $0x90] sm:$0xff]
        %v398 = vld [vmem:[%s299 + $0x98] sm:$0xff]
        %v399 = vld [vmem:[%s299 + $0xa0] sm:$0xff]
        %v400 = vld [vmem:[%s299 + $0xa8] sm:$0xff]
        %v401 = vld [vmem:[%s299 + $0xb0] sm:$0xff]
        %v402 = vld [vmem:[%s299 + $0xb8] sm:$0xff]
        %v403 = vld [vmem:[%s299 + $0xc0] sm:$0xff]
        %v404 = vld [vmem:[%s299 + $0xc8] sm:$0xff]
        %v405 = vld [vmem:[%s299 + $0xd0] sm:$0xff]
        %v406 = vld [vmem:[%s299 + $0xd8] sm:$0xff]
        %v407 = vld [vmem:[%s299 + $0xe0] sm:$0xff]
        %v408 = vld [vmem:[%s299 + $0xe8] sm:$0xff]
        %v409 = vld [vmem:[%s299 + $0xf0] sm:$0xff]
        %v410 = vld [vmem:[%s299 + $0xf8] sm:$0xff]
        %v411 = vld [vmem:[%s299 + $0x100] sm:$0xff]
        %v412 = vld [vmem:[%s299 + $0x108] sm:$0xff]
        %v413 = vld [vmem:[%s299 + $0x110] sm:$0xff]
        %v414 = vld [vmem:[%s299 + $0x118] sm:$0xff]
        %v415 = vld [vmem:[%s299 + $0x120] sm:$0xff]
        %v416 = vld [vmem:[%s299 + $0x128] sm:$0xff]
        %v417 = vld [vmem:[%s299 + $0x130] sm:$0xff]
        %v418 = vld [vmem:[%s299 + $0x138] sm:$0xff]
        %v419 = vld [vmem:[%s299 + $0x140] sm:$0xff]
        %v420 = vld [vmem:[%s299 + $0x148] sm:$0xff]
        %v421 = vld [vmem:[%s299 + $0x150] sm:$0xff]
        %v422 = vld [vmem:[%s299 + $0x158] sm:$0xff]
        %v423 = vld [vmem:[%s299 + $0x160] sm:$0xff]
        %v424 = vld [vmem:[%s299 + $0x168] sm:$0xff]
        %v425 = vld [vmem:[%s299 + $0x170] sm:$0xff]
        %v426 = vld [vmem:[%s299 + $0x178] sm:$0xff]
        %v427 = vld [vmem:[%s299 + $0x180] sm:$0xff]
        %v428 = vld [vmem:[%s299 + $0x188] sm:$0xff]
        %v429 = vld [vmem:[%s299 + $0x190] sm:$0xff]
        %v430 = vld [vmem:[%s299 + $0x198] sm:$0xff]
        %v431 = vld [vmem:[%s299 + $0x1a0] sm:$0xff]
        %v432 = vld [vmem:[%s299 + $0x1a8] sm:$0xff]
        %v433 = vld [vmem:[%s299 + $0x1b0] sm:$0xff]
        %v434 = vld [vmem:[%s299 + $0x1b8] sm:$0xff]
        %v435 = vld [vmem:[%s299 + $0x1c0] sm:$0xff]
        %v436 = vld [vmem:[%s299 + $0x1c8] sm:$0xff]
        %v437 = vld [vmem:[%s299 + $0x1d0] sm:$0xff]
        %v438 = vld [vmem:[%s299 + $0x1d8] sm:$0xff]
        %v439 = vld [vmem:[%s299 + $0x1e0] sm:$0xff]
        %v440 = vld [vmem:[%s299 + $0x1e8] sm:$0xff]
        %v441 = vld [vmem:[%s299 + $0x1f0] sm:$0xff]
        %v442 = vld [vmem:[%s299 + $0x1f8] sm:$0xff]
        %v443 = vld [vmem:[%s308] sm:$0xff]
        %v444 = vld [vmem:[%s308 + $0x8] sm:$0xff]
        %v445 = vld [vmem:[%s308 + $0x10] sm:$0xff]
        %v446 = vld [vmem:[%s308 + $0x18] sm:$0xff]
        %v447 = vld [vmem:[%s308 + $0x20] sm:$0xff]
        %v448 = vld [vmem:[%s308 + $0x28] sm:$0xff]
        %v449 = vld [vmem:[%s308 + $0x30] sm:$0xff]
        %v450 = vld [vmem:[%s308 + $0x38] sm:$0xff]
        %v451 = vld [vmem:[%s308 + $0x40] sm:$0xff]
        %v452 = vld [vmem:[%s308 + $0x48] sm:$0xff]
        %v453 = vld [vmem:[%s308 + $0x50] sm:$0xff]
        %v454 = vld [vmem:[%s308 + $0x58] sm:$0xff]
        %v455 = vld [vmem:[%s308 + $0x60] sm:$0xff]
        %v456 = vld [vmem:[%s308 + $0x68] sm:$0xff]
        %v457 = vld [vmem:[%s308 + $0x70] sm:$0xff]
        %v458 = vld [vmem:[%s308 + $0x78] sm:$0xff]
        %v459 = vld [vmem:[%s308 + $0x80] sm:$0xff]
        %v460 = vld [vmem:[%s308 + $0x88] sm:$0xff]
        %v461 = vld [vmem:[%s308 + $0x90] sm:$0xff]
        %v462 = vld [vmem:[%s308 + $0x98] sm:$0xff]
        %v463 = vld [vmem:[%s308 + $0xa0] sm:$0xff]
        %v464 = vld [vmem:[%s308 + $0xa8] sm:$0xff]
        %v465 = vld [vmem:[%s308 + $0xb0] sm:$0xff]
        %v466 = vld [vmem:[%s308 + $0xb8] sm:$0xff]
        %v467 = vld [vmem:[%s308 + $0xc0] sm:$0xff]
        %v468 = vld [vmem:[%s308 + $0xc8] sm:$0xff]
        %v469 = vld [vmem:[%s308 + $0xd0] sm:$0xff]
        %v470 = vld [vmem:[%s308 + $0xd8] sm:$0xff]
        %v471 = vld [vmem:[%s308 + $0xe0] sm:$0xff]
        %v472 = vld [vmem:[%s308 + $0xe8] sm:$0xff]
        %v473 = vld [vmem:[%s308 + $0xf0] sm:$0xff]
        %v474 = vld [vmem:[%s308 + $0xf8] sm:$0xff]
        %v475 = vld [vmem:[%s308 + $0x100] sm:$0xff]
        %v476 = vld [vmem:[%s308 + $0x108] sm:$0xff]
        %v477 = vld [vmem:[%s308 + $0x110] sm:$0xff]
        %v478 = vld [vmem:[%s308 + $0x118] sm:$0xff]
        %v479 = vld [vmem:[%s308 + $0x120] sm:$0xff]
        %v480 = vld [vmem:[%s308 + $0x128] sm:$0xff]
        %v481 = vld [vmem:[%s308 + $0x130] sm:$0xff]
        %v482 = vld [vmem:[%s308 + $0x138] sm:$0xff]
        %v483 = vld [vmem:[%s308 + $0x140] sm:$0xff]
        %v484 = vld [vmem:[%s308 + $0x148] sm:$0xff]
        %v485 = vld [vmem:[%s308 + $0x150] sm:$0xff]
        %v486 = vld [vmem:[%s308 + $0x158] sm:$0xff]
        %v487 = vld [vmem:[%s308 + $0x160] sm:$0xff]
        %v488 = vld [vmem:[%s308 + $0x168] sm:$0xff]
        %v489 = vld [vmem:[%s308 + $0x170] sm:$0xff]
        %v490 = vld [vmem:[%s308 + $0x178] sm:$0xff]
        %v491 = vld [vmem:[%s308 + $0x180] sm:$0xff]
        %v492 = vld [vmem:[%s308 + $0x188] sm:$0xff]
        %v493 = vld [vmem:[%s308 + $0x190] sm:$0xff]
        %v494 = vld [vmem:[%s308 + $0x198] sm:$0xff]
        %v495 = vld [vmem:[%s308 + $0x1a0] sm:$0xff]
        %v496 = vld [vmem:[%s308 + $0x1a8] sm:$0xff]
        %v497 = vld [vmem:[%s308 + $0x1b0] sm:$0xff]
        %v498 = vld [vmem:[%s308 + $0x1b8] sm:$0xff]
        %v499 = vld [vmem:[%s308 + $0x1c0] sm:$0xff]
        %v500 = vld [vmem:[%s308 + $0x1c8] sm:$0xff]
        %v501 = vld [vmem:[%s308 + $0x1d0] sm:$0xff]
        %v502 = vld [vmem:[%s308 + $0x1d8] sm:$0xff]
        %v503 = vld [vmem:[%s308 + $0x1e0] sm:$0xff]
        %v504 = vld [vmem:[%s308 + $0x1e8] sm:$0xff]
        %v505 = vld [vmem:[%s308 + $0x1f0] sm:$0xff]
        %v506 = vld [vmem:[%s308 + $0x1f8] sm:$0xff]
        %v507 = vld [vmem:[%s317] sm:$0xf]
        %v508 = vld [vmem:[#allocation2] sm:$0xff]
        %v509 = vld [vmem:[#allocation2 + $0x8] sm:$0xff]
        %v510 = vld [vmem:[#allocation2 + $0x10] sm:$0xff]
        %v511 = vld [vmem:[#allocation2 + $0x18] sm:$0xff]
        %v512 = vld [vmem:[#allocation2 + $0x20] sm:$0xff]
        %v513 = vld [vmem:[#allocation2 + $0x28] sm:$0xff]
        %v514 = vld [vmem:[#allocation2 + $0x30] sm:$0xff]
        %v515 = vld [vmem:[#allocation2 + $0x38] sm:$0xff]
        %v517 = vlaneseq
        %v518 = vshrl.u32 %v517, 7
        %v519 = vsub.s32 0, %v518
        %v520 = vrot.slane %v507, %v519
        %v521 = vlaneseq
        %v522 = vshrl.u32 %v521, 7
        %v523 = vsub.s32 1, %v522
        %v524 = vrot.slane %v507, %v523
        %v525 = vlaneseq
        %v526 = vshrl.u32 %v525, 7
        %v527 = vsub.s32 2, %v526
        %v528 = vrot.slane %v507, %v527
        %v529 = vlaneseq
        %v530 = vshrl.u32 %v529, 7
        %v531 = vsub.s32 3, %v530
        %v532 = vrot.slane %v507, %v531
        %537 = vmatprep.subr.mxu0 %v380
        %538 = vmatpush1.msra.mxu0 %v379
        %539 = vmatprep.subr.mxu0 %v384
        %540 = vmatpush1.msra.mxu0 %v383
        %541 = vmatprep.subr.mxu0 %v388
        %542 = vmatpush1.msra.mxu0 %v387
        %543 = vmatprep.subr.mxu0 %v392
        %544 = vmatpush1.msra.mxu0 %v391
        %545 = vmatprep.subr.mxu0 %v396
        %546 = vmatpush1.msra.mxu0 %v395
        %547 = vmatprep.subr.mxu0 %v400
        %548 = vmatpush1.msra.mxu0 %v399
        %549 = vmatprep.subr.mxu0 %v404
        %550 = vmatpush1.msra.mxu0 %v403
        %551 = vmatprep.subr.mxu0 %v408
        %552 = vmatpush1.msra.mxu0 %v407
        %553 = vmatprep.subr.mxu0 %v412
        %554 = vmatpush1.msra.mxu0 %v411
        %555 = vmatprep.subr.mxu0 %v416
        %556 = vmatpush1.msra.mxu0 %v415
        %557 = vmatprep.subr.mxu0 %v420
        %558 = vmatpush1.msra.mxu0 %v419
        %559 = vmatprep.subr.mxu0 %v424
        %560 = vmatpush1.msra.mxu0 %v423
        %561 = vmatprep.subr.mxu0 %v428
        %562 = vmatpush1.msra.mxu0 %v427
        %563 = vmatprep.subr.mxu0 %v432
        %564 = vmatpush1.msra.mxu0 %v431
        %565 = vmatprep.subr.mxu0 %v436
        %566 = vmatpush1.msra.mxu0 %v435
        %567 = vmatprep.subr.mxu0 %v440
        %568 = vmatpush1.msra.mxu0 %v439
        %569 = vmatprep.subr.mxu0 0.0
        %570 = vmatpush1.msra.mxu0 0.0
        %571 = vmatprep.subr.mxu0 0.0
        %572 = vmatpush1.msra.mxu0 0.0
        %573 = vmatprep.subr.mxu0 0.0
        %574 = vmatpush1.msra.mxu0 0.0
        %575 = vmatprep.subr.mxu0 0.0
        %576 = vmatpush1.msra.mxu0 0.0
        %577 = vmatprep.subr.mxu0 0.0
        %578 = vmatpush1.msra.mxu0 0.0
        %579 = vmatprep.subr.mxu0 0.0
        %580 = vmatpush1.msra.mxu0 0.0
        %581 = vmatprep.subr.mxu0 0.0
        %582 = vmatpush1.msra.mxu0 0.0
        %583 = vmatprep.subr.mxu0 0.0
        %584 = vmatpush1.msra.mxu0 0.0
        %585 = vmatprep.subr.mxu0 0.0
        %586 = vmatpush1.msra.mxu0 0.0
        %587 = vmatprep.subr.mxu0 0.0
        %588 = vmatpush1.msra.mxu0 0.0
        %589 = vmatprep.subr.mxu0 0.0
        %590 = vmatpush1.msra.mxu0 0.0
        %591 = vmatprep.subr.mxu0 0.0
        %592 = vmatpush1.msra.mxu0 0.0
        %593 = vmatprep.subr.mxu0 0.0
        %594 = vmatpush1.msra.mxu0 0.0
        %595 = vmatprep.subr.mxu0 0.0
        %596 = vmatpush1.msra.mxu0 0.0
        %597 = vmatprep.subr.mxu0 0.0
        %598 = vmatpush1.msra.mxu0 0.0
        %599 = vmatprep.subr.mxu0 0.0
        %600 = vmatpush1.msra.mxu0 0.0
        %601 = vmatprep.mubr.f32.mxu0 0.0
        %602 = vmatmul.mubr.f32.gmra.mrb[0].mxu0 %v508
        %v603 = vpop.f32.mrb[0].mxu0
        %v604 = vadd.f32 %v520, %v603
        %v605 = vpop.f32.mrb[0].mxu0
        %v606 = vadd.f32 %v524, %v605
        %607 = vmatprep.mubr.f32.mxu0 0.0
        %608 = vmatmul.mubr.f32.gmra.mrb[0].mxu0 %v509
        %v609 = vpop.f32.mrb[0].mxu0
        %v610 = vadd.f32 %v520, %v609
        %v611 = vpop.f32.mrb[0].mxu0
        %v612 = vadd.f32 %v524, %v611
        %613 = vmatprep.mubr.f32.mxu0 0.0
        %614 = vmatmul.mubr.f32.gmra.mrb[0].mxu0 %v510
        %v615 = vpop.f32.mrb[0].mxu0
        %v616 = vadd.f32 %v520, %v615
        %v617 = vpop.f32.mrb[0].mxu0
        %v618 = vadd.f32 %v524, %v617
        %619 = vmatprep.mubr.f32.mxu0 0.0
        %620 = vmatmul.mubr.f32.gmra.mrb[0].mxu0 %v511
        %v621 = vpop.f32.mrb[0].mxu0
        %v622 = vadd.f32 %v520, %v621
        %v623 = vpop.f32.mrb[0].mxu0
        %v624 = vadd.f32 %v524, %v623
        %625 = vmatprep.mubr.f32.mxu0 0.0
        %626 = vmatmul.mubr.f32.gmra.mrb[0].mxu0 %v512
        %v627 = vpop.f32.mrb[0].mxu0
        %v628 = vadd.f32 %v520, %v627
        %v629 = vpop.f32.mrb[0].mxu0
        %v630 = vadd.f32 %v524, %v629
        %631 = vmatprep.mubr.f32.mxu0 0.0
        %632 = vmatmul.mubr.f32.gmra.mrb[0].mxu0 %v513
        %v633 = vpop.f32.mrb[0].mxu0
        %v634 = vadd.f32 %v520, %v633
        %v635 = vpop.f32.mrb[0].mxu0
        %v636 = vadd.f32 %v524, %v635
        %637 = vmatprep.mubr.f32.mxu0 0.0
        %638 = vmatmul.mubr.f32.gmra.mrb[0].mxu0 %v514
        %v639 = vpop.f32.mrb[0].mxu0
        %v640 = vadd.f32 %v520, %v639
        %v641 = vpop.f32.mrb[0].mxu0
        %v642 = vadd.f32 %v524, %v641
        %643 = vmatprep.mubr.f32.mxu0 0.0
        %644 = vmatmul.mubr.f32.gmra.mrb[0].mxu0 %v515
        %v645 = vpop.f32.mrb[0].mxu0
        %v646 = vadd.f32 %v520, %v645
        %v647 = vpop.f32.mrb[0].mxu0
        %v648 = vadd.f32 %v524, %v647
        %649 = vdwg.mxu0
        %650 = vmatprep.subr.mxu0 %v382
        %651 = vmatpush1.msra.mxu0 %v381
        %652 = vmatprep.subr.mxu0 %v386
        %653 = vmatpush1.msra.mxu0 %v385
        %654 = vmatprep.subr.mxu0 %v390
        %655 = vmatpush1.msra.mxu0 %v389
        %656 = vmatprep.subr.mxu0 %v394
        %657 = vmatpush1.msra.mxu0 %v393
        %658 = vmatprep.subr.mxu0 %v398
        %659 = vmatpush1.msra.mxu0 %v397
        %660 = vmatprep.subr.mxu0 %v402
        %661 = vmatpush1.msra.mxu0 %v401
        %662 = vmatprep.subr.mxu0 %v406
        %663 = vmatpush1.msra.mxu0 %v405
        %664 = vmatprep.subr.mxu0 %v410
        %665 = vmatpush1.msra.mxu0 %v409
        %666 = vmatprep.subr.mxu0 %v414
        %667 = vmatpush1.msra.mxu0 %v413
        %668 = vmatprep.subr.mxu0 %v418
        %669 = vmatpush1.msra.mxu0 %v417
        %670 = vmatprep.subr.mxu0 %v422
        %671 = vmatpush1.msra.mxu0 %v421
        %672 = vmatprep.subr.mxu0 %v426
        %673 = vmatpush1.msra.mxu0 %v425
        %674 = vmatprep.subr.mxu0 %v430
        %675 = vmatpush1.msra.mxu0 %v429
        %676 = vmatprep.subr.mxu0 %v434
        %677 = vmatpush1.msra.mxu0 %v433
        %678 = vmatprep.subr.mxu0 %v438
        %679 = vmatpush1.msra.mxu0 %v437
        %680 = vmatprep.subr.mxu0 %v442
        %681 = vmatpush1.msra.mxu0 %v441
        %682 = vmatprep.subr.mxu0 0.0
        %683 = vmatpush1.msra.mxu0 0.0
        %684 = vmatprep.subr.mxu0 0.0
        %685 = vmatpush1.msra.mxu0 0.0
        %686 = vmatprep.subr.mxu0 0.0
        %687 = vmatpush1.msra.mxu0 0.0
        %688 = vmatprep.subr.mxu0 0.0
        %689 = vmatpush1.msra.mxu0 0.0
        %690 = vmatprep.subr.mxu0 0.0
        %691 = vmatpush1.msra.mxu0 0.0
        %692 = vmatprep.subr.mxu0 0.0
        %693 = vmatpush1.msra.mxu0 0.0
        %694 = vmatprep.subr.mxu0 0.0
        %695 = vmatpush1.msra.mxu0 0.0
        %696 = vmatprep.subr.mxu0 0.0
        %697 = vmatpush1.msra.mxu0 0.0
        %698 = vmatprep.subr.mxu0 0.0
        %699 = vmatpush1.msra.mxu0 0.0
        %700 = vmatprep.subr.mxu0 0.0
        %701 = vmatpush1.msra.mxu0 0.0
        %702 = vmatprep.subr.mxu0 0.0
        %703 = vmatpush1.msra.mxu0 0.0
        %704 = vmatprep.subr.mxu0 0.0
        %705 = vmatpush1.msra.mxu0 0.0
        %706 = vmatprep.subr.mxu0 0.0
        %707 = vmatpush1.msra.mxu0 0.0
        %708 = vmatprep.subr.mxu0 0.0
        %709 = vmatpush1.msra.mxu0 0.0
        %710 = vmatprep.subr.mxu0 0.0
        %711 = vmatpush1.msra.mxu0 0.0
        %712 = vmatprep.subr.mxu0 0.0
        %713 = vmatpush1.msra.mxu0 0.0
        %714 = vmatprep.mubr.f32.mxu0 0.0
        %715 = vmatmul.mubr.f32.gmra.mrb[0].mxu0 %v508
        %v716 = vpop.f32.mrb[0].mxu0
        %v717 = vadd.f32 %v528, %v716
        %v718 = vpop.f32.mrb[0].mxu0
        %v719 = vadd.f32 %v532, %v718
        %720 = vmatprep.mubr.f32.mxu0 0.0
        %721 = vmatmul.mubr.f32.gmra.mrb[0].mxu0 %v509
        %v722 = vpop.f32.mrb[0].mxu0
        %v723 = vadd.f32 %v528, %v722
        %v724 = vpop.f32.mrb[0].mxu0
        %v725 = vadd.f32 %v532, %v724
        %726 = vmatprep.mubr.f32.mxu0 0.0
        %727 = vmatmul.mubr.f32.gmra.mrb[0].mxu0 %v510
        %v728 = vpop.f32.mrb[0].mxu0
        %v729 = vadd.f32 %v528, %v728
        %v730 = vpop.f32.mrb[0].mxu0
        %v731 = vadd.f32 %v532, %v730
        %732 = vmatprep.mubr.f32.mxu0 0.0
        %733 = vmatmul.mubr.f32.gmra.mrb[0].mxu0 %v511
        %v734 = vpop.f32.mrb[0].mxu0
        %v735 = vadd.f32 %v528, %v734
        %v736 = vpop.f32.mrb[0].mxu0
        %v737 = vadd.f32 %v532, %v736
        %738 = vmatprep.mubr.f32.mxu0 0.0
        %739 = vmatmul.mubr.f32.gmra.mrb[0].mxu0 %v512
        %v740 = vpop.f32.mrb[0].mxu0
        %v741 = vadd.f32 %v528, %v740
        %v742 = vpop.f32.mrb[0].mxu0
        %v743 = vadd.f32 %v532, %v742
        %744 = vmatprep.mubr.f32.mxu0 0.0
        %745 = vmatmul.mubr.f32.gmra.mrb[0].mxu0 %v513
        %v746 = vpop.f32.mrb[0].mxu0
        %v747 = vadd.f32 %v528, %v746
        %v748 = vpop.f32.mrb[0].mxu0
        %v749 = vadd.f32 %v532, %v748
        %750 = vmatprep.mubr.f32.mxu0 0.0
        %751 = vmatmul.mubr.f32.gmra.mrb[0].mxu0 %v514
        %v752 = vpop.f32.mrb[0].mxu0
        %v753 = vadd.f32 %v528, %v752
        %v754 = vpop.f32.mrb[0].mxu0
        %v755 = vadd.f32 %v532, %v754
        %756 = vmatprep.mubr.f32.mxu0 0.0
        %757 = vmatmul.mubr.f32.gmra.mrb[0].mxu0 %v515
        %v758 = vpop.f32.mrb[0].mxu0
        %v759 = vadd.f32 %v528, %v758
        %v760 = vpop.f32.mrb[0].mxu0
        %v761 = vadd.f32 %v532, %v760
        %762 = vdwg.mxu0
        %763 = vmatprep.subr.mxu0 %v444
        %764 = vmatpush1.msra.mxu0 %v443
        %765 = vmatprep.subr.mxu0 %v448
        %766 = vmatpush1.msra.mxu0 %v447
        %767 = vmatprep.subr.mxu0 %v452
        %768 = vmatpush1.msra.mxu0 %v451
        %769 = vmatprep.subr.mxu0 %v456
        %770 = vmatpush1.msra.mxu0 %v455
        %771 = vmatprep.subr.mxu0 %v460
        %772 = vmatpush1.msra.mxu0 %v459
        %773 = vmatprep.subr.mxu0 %v464
        %774 = vmatpush1.msra.mxu0 %v463
        %775 = vmatprep.subr.mxu0 %v468
        %776 = vmatpush1.msra.mxu0 %v467
        %777 = vmatprep.subr.mxu0 %v472
        %778 = vmatpush1.msra.mxu0 %v471
        %779 = vmatprep.subr.mxu0 %v476
        %780 = vmatpush1.msra.mxu0 %v475
        %781 = vmatprep.subr.mxu0 %v480
        %782 = vmatpush1.msra.mxu0 %v479
        %783 = vmatprep.subr.mxu0 %v484
        %784 = vmatpush1.msra.mxu0 %v483
        %785 = vmatprep.subr.mxu0 %v488
        %786 = vmatpush1.msra.mxu0 %v487
        %787 = vmatprep.subr.mxu0 %v492
        %788 = vmatpush1.msra.mxu0 %v491
        %789 = vmatprep.subr.mxu0 %v496
        %790 = vmatpush1.msra.mxu0 %v495
        %791 = vmatprep.subr.mxu0 %v500
        %792 = vmatpush1.msra.mxu0 %v499
        %793 = vmatprep.subr.mxu0 %v504
        %794 = vmatpush1.msra.mxu0 %v503
        %795 = vmatprep.subr.mxu0 0.0
        %796 = vmatpush1.msra.mxu0 0.0
        %797 = vmatprep.subr.mxu0 0.0
        %798 = vmatpush1.msra.mxu0 0.0
        %799 = vmatprep.subr.mxu0 0.0
        %800 = vmatpush1.msra.mxu0 0.0
        %801 = vmatprep.subr.mxu0 0.0
        %802 = vmatpush1.msra.mxu0 0.0
        %803 = vmatprep.subr.mxu0 0.0
        %804 = vmatpush1.msra.mxu0 0.0
        %805 = vmatprep.subr.mxu0 0.0
        %806 = vmatpush1.msra.mxu0 0.0
        %807 = vmatprep.subr.mxu0 0.0
        %808 = vmatpush1.msra.mxu0 0.0
        %809 = vmatprep.subr.mxu0 0.0
        %810 = vmatpush1.msra.mxu0 0.0
        %811 = vmatprep.subr.mxu0 0.0
        %812 = vmatpush1.msra.mxu0 0.0
        %813 = vmatprep.subr.mxu0 0.0
        %814 = vmatpush1.msra.mxu0 0.0
        %815 = vmatprep.subr.mxu0 0.0
        %816 = vmatpush1.msra.mxu0 0.0
        %817 = vmatprep.subr.mxu0 0.0
        %818 = vmatpush1.msra.mxu0 0.0
        %819 = vmatprep.subr.mxu0 0.0
        %820 = vmatpush1.msra.mxu0 0.0
        %821 = vmatprep.subr.mxu0 0.0
        %822 = vmatpush1.msra.mxu0 0.0
        %823 = vmatprep.subr.mxu0 0.0
        %824 = vmatpush1.msra.mxu0 0.0
        %825 = vmatprep.subr.mxu0 0.0
        %826 = vmatpush1.msra.mxu0 0.0
        %827 = vmatprep.mubr.f32.mxu0 0.0
        %828 = vmatmul.mubr.f32.gmra.mrb[0].mxu0 0.0
        %v829 = vpop.f32.mrb[0].mxu0
        %v830 = vadd.f32 0.0, %v829
        %v831 = vpop.f32.mrb[0].mxu0
        %v832 = vadd.f32 0.0, %v831
        %833 = vdwg.mxu0
        %834 = vmatprep.subr.mxu0 %v446
        %835 = vmatpush1.msra.mxu0 %v445
        %836 = vmatprep.subr.mxu0 %v450
        %837 = vmatpush1.msra.mxu0 %v449
        %838 = vmatprep.subr.mxu0 %v454
        %839 = vmatpush1.msra.mxu0 %v453
        %840 = vmatprep.subr.mxu0 %v458
        %841 = vmatpush1.msra.mxu0 %v457
        %842 = vmatprep.subr.mxu0 %v462
        %843 = vmatpush1.msra.mxu0 %v461
        %844 = vmatprep.subr.mxu0 %v466
        %845 = vmatpush1.msra.mxu0 %v465
        %846 = vmatprep.subr.mxu0 %v470
        %847 = vmatpush1.msra.mxu0 %v469
        %848 = vmatprep.subr.mxu0 %v474
        %849 = vmatpush1.msra.mxu0 %v473
        %850 = vmatprep.subr.mxu0 %v478
        %851 = vmatpush1.msra.mxu0 %v477
        %852 = vmatprep.subr.mxu0 %v482
        %853 = vmatpush1.msra.mxu0 %v481
        %854 = vmatprep.subr.mxu0 %v486
        %855 = vmatpush1.msra.mxu0 %v485
        %856 = vmatprep.subr.mxu0 %v490
        %857 = vmatpush1.msra.mxu0 %v489
        %858 = vmatprep.subr.mxu0 %v494
        %859 = vmatpush1.msra.mxu0 %v493
        %860 = vmatprep.subr.mxu0 %v498
        %861 = vmatpush1.msra.mxu0 %v497
        %862 = vmatprep.subr.mxu0 %v502
        %863 = vmatpush1.msra.mxu0 %v501
        %864 = vmatprep.subr.mxu0 %v506
        %865 = vmatpush1.msra.mxu0 %v505
        %866 = vmatprep.subr.mxu0 0.0
        %867 = vmatpush1.msra.mxu0 0.0
        %868 = vmatprep.subr.mxu0 0.0
        %869 = vmatpush1.msra.mxu0 0.0
        %870 = vmatprep.subr.mxu0 0.0
        %871 = vmatpush1.msra.mxu0 0.0
        %872 = vmatprep.subr.mxu0 0.0
        %873 = vmatpush1.msra.mxu0 0.0
        %874 = vmatprep.subr.mxu0 0.0
        %875 = vmatpush1.msra.mxu0 0.0
        %876 = vmatprep.subr.mxu0 0.0
        %877 = vmatpush1.msra.mxu0 0.0
        %878 = vmatprep.subr.mxu0 0.0
        %879 = vmatpush1.msra.mxu0 0.0
        %880 = vmatprep.subr.mxu0 0.0
        %881 = vmatpush1.msra.mxu0 0.0
        %882 = vmatprep.subr.mxu0 0.0
        %883 = vmatpush1.msra.mxu0 0.0
        %884 = vmatprep.subr.mxu0 0.0
        %885 = vmatpush1.msra.mxu0 0.0
        %886 = vmatprep.subr.mxu0 0.0
        %887 = vmatpush1.msra.mxu0 0.0
        %888 = vmatprep.subr.mxu0 0.0
        %889 = vmatpush1.msra.mxu0 0.0
        %890 = vmatprep.subr.mxu0 0.0
        %891 = vmatpush1.msra.mxu0 0.0
        %892 = vmatprep.subr.mxu0 0.0
        %893 = vmatpush1.msra.mxu0 0.0
        %894 = vmatprep.subr.mxu0 0.0
        %895 = vmatpush1.msra.mxu0 0.0
        %896 = vmatprep.subr.mxu0 0.0
        %897 = vmatpush1.msra.mxu0 0.0
        %898 = vmatprep.mubr.f32.mxu0 0.0
        %899 = vmatmul.mubr.f32.gmra.mrb[0].mxu0 0.0
        %v900 = vpop.f32.mrb[0].mxu0
        %v901 = vadd.f32 0.0, %v900
        %v902 = vpop.f32.mrb[0].mxu0
        %v903 = vadd.f32 0.0, %v902
        %904 = vdwg.mxu0
        %v905 = vadd.f32 %v604, %v830
        %v906 = vadd.f32 %v606, %v832
        %v907 = vadd.f32 %v717, %v901
        %v908 = vadd.f32 %v719, %v903
        %v909 = vxor.u32 %v905, 2147483648
        %v910 = vmul.f32 %v909, 1.442695
        %v911 = vpow.pop %v910
        %v912 = vadd.f32 %v911, 1.0
        %v913 = vrcp.pop %v912
        %v914 = vmul.f32 1.0, %v913
        %v915 = vxor.u32 %v906, 2147483648
        %v916 = vmul.f32 %v915, 1.442695
        %v917 = vpow.pop %v916
        %v918 = vadd.f32 %v917, 1.0
        %v919 = vrcp.pop %v918
        %v920 = vmul.f32 1.0, %v919
        %v921 = vtanh.pop %v907
        %v922 = vxor.u32 %v908, 2147483648
        %v923 = vmul.f32 %v922, 1.442695
        %v924 = vpow.pop %v923
        %v925 = vadd.f32 %v924, 1.0
        %v926 = vrcp.pop %v925
        %v927 = vmul.f32 1.0, %v926
        %v928 = vmul.f32 %v920, 0.0
        %v929 = vmul.f32 %v914, %v921
        %v930 = vadd.f32 %v928, %v929
        %v931 = vtanh.pop %v930
        %v932 = vmul.f32 %v927, %v931
        %933 = vst [vmem:[#allocation2] sm:$0xff] %v932
        %934 = vmatprep.subr.mxu0 %v444
        %935 = vmatpush1.msra.mxu0 %v443
        %936 = vmatprep.subr.mxu0 %v448
        %937 = vmatpush1.msra.mxu0 %v447
        %938 = vmatprep.subr.mxu0 %v452
        %939 = vmatpush1.msra.mxu0 %v451
        %940 = vmatprep.subr.mxu0 %v456
        %941 = vmatpush1.msra.mxu0 %v455
        %942 = vmatprep.subr.mxu0 %v460
        %943 = vmatpush1.msra.mxu0 %v459
        %944 = vmatprep.subr.mxu0 %v464
        %945 = vmatpush1.msra.mxu0 %v463
        %946 = vmatprep.subr.mxu0 %v468
        %947 = vmatpush1.msra.mxu0 %v467
        %948 = vmatprep.subr.mxu0 %v472
        %949 = vmatpush1.msra.mxu0 %v471
        %950 = vmatprep.subr.mxu0 %v476
        %951 = vmatpush1.msra.mxu0 %v475
        %952 = vmatprep.subr.mxu0 %v480
        %953 = vmatpush1.msra.mxu0 %v479
        %954 = vmatprep.subr.mxu0 %v484
        %955 = vmatpush1.msra.mxu0 %v483
        %956 = vmatprep.subr.mxu0 %v488
        %957 = vmatpush1.msra.mxu0 %v487
        %958 = vmatprep.subr.mxu0 %v492
        %959 = vmatpush1.msra.mxu0 %v491
        %960 = vmatprep.subr.mxu0 %v496
        %961 = vmatpush1.msra.mxu0 %v495
        %962 = vmatprep.subr.mxu0 %v500
        %963 = vmatpush1.msra.mxu0 %v499
        %964 = vmatprep.subr.mxu0 %v504
        %965 = vmatpush1.msra.mxu0 %v503
        %966 = vmatprep.subr.mxu0 0.0
        %967 = vmatpush1.msra.mxu0 0.0
        %968 = vmatprep.subr.mxu0 0.0
        %969 = vmatpush1.msra.mxu0 0.0
        %970 = vmatprep.subr.mxu0 0.0
        %971 = vmatpush1.msra.mxu0 0.0
        %972 = vmatprep.subr.mxu0 0.0
        %973 = vmatpush1.msra.mxu0 0.0
        %974 = vmatprep.subr.mxu0 0.0
        %975 = vmatpush1.msra.mxu0 0.0
        %976 = vmatprep.subr.mxu0 0.0
        %977 = vmatpush1.msra.mxu0 0.0
        %978 = vmatprep.subr.mxu0 0.0
        %979 = vmatpush1.msra.mxu0 0.0
        %980 = vmatprep.subr.mxu0 0.0
        %981 = vmatpush1.msra.mxu0 0.0
        %982 = vmatprep.subr.mxu0 0.0
        %983 = vmatpush1.msra.mxu0 0.0
        %984 = vmatprep.subr.mxu0 0.0
        %985 = vmatpush1.msra.mxu0 0.0
        %986 = vmatprep.subr.mxu0 0.0
        %987 = vmatpush1.msra.mxu0 0.0
        %988 = vmatprep.subr.mxu0 0.0
        %989 = vmatpush1.msra.mxu0 0.0
        %990 = vmatprep.subr.mxu0 0.0
        %991 = vmatpush1.msra.mxu0 0.0
        %992 = vmatprep.subr.mxu0 0.0
        %993 = vmatpush1.msra.mxu0 0.0
        %994 = vmatprep.subr.mxu0 0.0
        %995 = vmatpush1.msra.mxu0 0.0
        %996 = vmatprep.subr.mxu0 0.0
        %997 = vmatpush1.msra.mxu0 0.0
        %998 = vmatprep.mubr.f32.mxu0 0.0
        %999 = vmatmul.mubr.f32.gmra.mrb[0].mxu0 %v932
        %v1000 = vpop.f32.mrb[0].mxu0
        %v1001 = vadd.f32 0.0, %v1000
        %v1002 = vpop.f32.mrb[0].mxu0
        %v1003 = vadd.f32 0.0, %v1002
        %1004 = vdwg.mxu0
        %1005 = vmatprep.subr.mxu0 %v446
        %1006 = vmatpush1.msra.mxu0 %v445
        %1007 = vmatprep.subr.mxu0 %v450
        %1008 = vmatpush1.msra.mxu0 %v449
        %1009 = vmatprep.subr.mxu0 %v454
        %1010 = vmatpush1.msra.mxu0 %v453
        %1011 = vmatprep.subr.mxu0 %v458
        %1012 = vmatpush1.msra.mxu0 %v457
        %1013 = vmatprep.subr.mxu0 %v462
        %1014 = vmatpush1.msra.mxu0 %v461
        %1015 = vmatprep.subr.mxu0 %v466
        %1016 = vmatpush1.msra.mxu0 %v465
        %1017 = vmatprep.subr.mxu0 %v470
        %1018 = vmatpush1.msra.mxu0 %v469
        %1019 = vmatprep.subr.mxu0 %v474
        %1020 = vmatpush1.msra.mxu0 %v473
        %1021 = vmatprep.subr.mxu0 %v478
        %1022 = vmatpush1.msra.mxu0 %v477
        %1023 = vmatprep.subr.mxu0 %v482
        %1024 = vmatpush1.msra.mxu0 %v481
        %1025 = vmatprep.subr.mxu0 %v486
        %1026 = vmatpush1.msra.mxu0 %v485
        %1027 = vmatprep.subr.mxu0 %v490
        %1028 = vmatpush1.msra.mxu0 %v489
        %1029 = vmatprep.subr.mxu0 %v494
        %1030 = vmatpush1.msra.mxu0 %v493
        %1031 = vmatprep.subr.mxu0 %v498
        %1032 = vmatpush1.msra.mxu0 %v497
        %1033 = vmatprep.subr.mxu0 %v502
        %1034 = vmatpush1.msra.mxu0 %v501
        %1035 = vmatprep.subr.mxu0 %v506
        %1036 = vmatpush1.msra.mxu0 %v505
        %1037 = vmatprep.subr.mxu0 0.0
        %1038 = vmatpush1.msra.mxu0 0.0
        %1039 = vmatprep.subr.mxu0 0.0
        %1040 = vmatpush1.msra.mxu0 0.0
        %1041 = vmatprep.subr.mxu0 0.0
        %1042 = vmatpush1.msra.mxu0 0.0
        %1043 = vmatprep.subr.mxu0 0.0
        %1044 = vmatpush1.msra.mxu0 0.0
        %1045 = vmatprep.subr.mxu0 0.0
        %1046 = vmatpush1.msra.mxu0 0.0
        %1047 = vmatprep.subr.mxu0 0.0
        %1048 = vmatpush1.msra.mxu0 0.0
        %1049 = vmatprep.subr.mxu0 0.0
        %1050 = vmatpush1.msra.mxu0 0.0
        %1051 = vmatprep.subr.mxu0 0.0
        %1052 = vmatpush1.msra.mxu0 0.0
        %1053 = vmatprep.subr.mxu0 0.0
        %1054 = vmatpush1.msra.mxu0 0.0
        %1055 = vmatprep.subr.mxu0 0.0
        %1056 = vmatpush1.msra.mxu0 0.0
        %1057 = vmatprep.subr.mxu0 0.0
        %1058 = vmatpush1.msra.mxu0 0.0
        %1059 = vmatprep.subr.mxu0 0.0
        %1060 = vmatpush1.msra.mxu0 0.0
        %1061 = vmatprep.subr.mxu0 0.0
        %1062 = vmatpush1.msra.mxu0 0.0
        %1063 = vmatprep.subr.mxu0 0.0
        %1064 = vmatpush1.msra.mxu0 0.0
        %1065 = vmatprep.subr.mxu0 0.0
        %1066 = vmatpush1.msra.mxu0 0.0
        %1067 = vmatprep.subr.mxu0 0.0
        %1068 = vmatpush1.msra.mxu0 0.0
        %1069 = vmatprep.mubr.f32.mxu0 0.0
        %1070 = vmatmul.mubr.f32.gmra.mrb[0].mxu0 %v932
        %v1071 = vpop.f32.mrb[0].mxu0
        %v1072 = vadd.f32 0.0, %v1071
        %v1073 = vpop.f32.mrb[0].mxu0
        %v1074 = vadd.f32 0.0, %v1073
        %1075 = vdwg.mxu0
        %v1076 = vadd.f32 %v610, %v1001
        %v1077 = vadd.f32 %v612, %v1003
        %v1078 = vadd.f32 %v723, %v1072
        %v1079 = vadd.f32 %v725, %v1074
        %v1080 = vxor.u32 %v1076, 2147483648
        %v1081 = vmul.f32 %v1080, 1.442695
        %v1082 = vpow.pop %v1081
        %v1083 = vadd.f32 %v1082, 1.0
        %v1084 = vrcp.pop %v1083
        %v1085 = vmul.f32 1.0, %v1084
        %v1086 = vxor.u32 %v1077, 2147483648
        %v1087 = vmul.f32 %v1086, 1.442695
        %v1088 = vpow.pop %v1087
        %v1089 = vadd.f32 %v1088, 1.0
        %v1090 = vrcp.pop %v1089
        %v1091 = vmul.f32 1.0, %v1090
        %v1092 = vtanh.pop %v1078
        %v1093 = vxor.u32 %v1079, 2147483648
        %v1094 = vmul.f32 %v1093, 1.442695
        %v1095 = vpow.pop %v1094
        %v1096 = vadd.f32 %v1095, 1.0
        %v1097 = vrcp.pop %v1096
        %v1098 = vmul.f32 1.0, %v1097
        %v1099 = vmul.f32 %v1091, %v930
        %v1100 = vmul.f32 %v1085, %v1092
        %v1101 = vadd.f32 %v1099, %v1100
        %v1102 = vtanh.pop %v1101
        %v1103 = vmul.f32 %v1098, %v1102
        %1104 = vst [vmem:[#allocation2 + $0x8] sm:$0xff] %v1103
        %1105 = vmatprep.subr.mxu0 %v444
        %1106 = vmatpush1.msra.mxu0 %v443
        %1107 = vmatprep.subr.mxu0 %v448
        %1108 = vmatpush1.msra.mxu0 %v447
        %1109 = vmatprep.subr.mxu0 %v452
        %1110 = vmatpush1.msra.mxu0 %v451
        %1111 = vmatprep.subr.mxu0 %v456
        %1112 = vmatpush1.msra.mxu0 %v455
        %1113 = vmatprep.subr.mxu0 %v460
        %1114 = vmatpush1.msra.mxu0 %v459
        %1115 = vmatprep.subr.mxu0 %v464
        %1116 = vmatpush1.msra.mxu0 %v463
        %1117 = vmatprep.subr.mxu0 %v468
        %1118 = vmatpush1.msra.mxu0 %v467
        %1119 = vmatprep.subr.mxu0 %v472
        %1120 = vmatpush1.msra.mxu0 %v471
        %1121 = vmatprep.subr.mxu0 %v476
        %1122 = vmatpush1.msra.mxu0 %v475
        %1123 = vmatprep.subr.mxu0 %v480
        %1124 = vmatpush1.msra.mxu0 %v479
        %1125 = vmatprep.subr.mxu0 %v484
        %1126 = vmatpush1.msra.mxu0 %v483
        %1127 = vmatprep.subr.mxu0 %v488
        %1128 = vmatpush1.msra.mxu0 %v487
        %1129 = vmatprep.subr.mxu0 %v492
        %1130 = vmatpush1.msra.mxu0 %v491
        %1131 = vmatprep.subr.mxu0 %v496
        %1132 = vmatpush1.msra.mxu0 %v495
        %1133 = vmatprep.subr.mxu0 %v500
        %1134 = vmatpush1.msra.mxu0 %v499
        %1135 = vmatprep.subr.mxu0 %v504
        %1136 = vmatpush1.msra.mxu0 %v503
        %1137 = vmatprep.subr.mxu0 0.0
        %1138 = vmatpush1.msra.mxu0 0.0
        %1139 = vmatprep.subr.mxu0 0.0
        %1140 = vmatpush1.msra.mxu0 0.0
        %1141 = vmatprep.subr.mxu0 0.0
        %1142 = vmatpush1.msra.mxu0 0.0
        %1143 = vmatprep.subr.mxu0 0.0
        %1144 = vmatpush1.msra.mxu0 0.0
        %1145 = vmatprep.subr.mxu0 0.0
        %1146 = vmatpush1.msra.mxu0 0.0
        %1147 = vmatprep.subr.mxu0 0.0
        %1148 = vmatpush1.msra.mxu0 0.0
        %1149 = vmatprep.subr.mxu0 0.0
        %1150 = vmatpush1.msra.mxu0 0.0
        %1151 = vmatprep.subr.mxu0 0.0
        %1152 = vmatpush1.msra.mxu0 0.0
        %1153 = vmatprep.subr.mxu0 0.0
        %1154 = vmatpush1.msra.mxu0 0.0
        %1155 = vmatprep.subr.mxu0 0.0
        %1156 = vmatpush1.msra.mxu0 0.0
        %1157 = vmatprep.subr.mxu0 0.0
        %1158 = vmatpush1.msra.mxu0 0.0
        %1159 = vmatprep.subr.mxu0 0.0
        %1160 = vmatpush1.msra.mxu0 0.0
        %1161 = vmatprep.subr.mxu0 0.0
        %1162 = vmatpush1.msra.mxu0 0.0
        %1163 = vmatprep.subr.mxu0 0.0
        %1164 = vmatpush1.msra.mxu0 0.0
        %1165 = vmatprep.subr.mxu0 0.0
        %1166 = vmatpush1.msra.mxu0 0.0
        %1167 = vmatprep.subr.mxu0 0.0
        %1168 = vmatpush1.msra.mxu0 0.0
        %1169 = vmatprep.mubr.f32.mxu0 0.0
        %1170 = vmatmul.mubr.f32.gmra.mrb[0].mxu0 %v1103
        %v1171 = vpop.f32.mrb[0].mxu0
        %v1172 = vadd.f32 0.0, %v1171
        %v1173 = vpop.f32.mrb[0].mxu0
        %v1174 = vadd.f32 0.0, %v1173
        %1175 = vdwg.mxu0
        %1176 = vmatprep.subr.mxu0 %v446
        %1177 = vmatpush1.msra.mxu0 %v445
        %1178 = vmatprep.subr.mxu0 %v450
        %1179 = vmatpush1.msra.mxu0 %v449
        %1180 = vmatprep.subr.mxu0 %v454
        %1181 = vmatpush1.msra.mxu0 %v453
        %1182 = vmatprep.subr.mxu0 %v458
        %1183 = vmatpush1.msra.mxu0 %v457
        %1184 = vmatprep.subr.mxu0 %v462
        %1185 = vmatpush1.msra.mxu0 %v461
        %1186 = vmatprep.subr.mxu0 %v466
        %1187 = vmatpush1.msra.mxu0 %v465
        %1188 = vmatprep.subr.mxu0 %v470
        %1189 = vmatpush1.msra.mxu0 %v469
        %1190 = vmatprep.subr.mxu0 %v474
        %1191 = vmatpush1.msra.mxu0 %v473
        %1192 = vmatprep.subr.mxu0 %v478
        %1193 = vmatpush1.msra.mxu0 %v477
        %1194 = vmatprep.subr.mxu0 %v482
        %1195 = vmatpush1.msra.mxu0 %v481
        %1196 = vmatprep.subr.mxu0 %v486
        %1197 = vmatpush1.msra.mxu0 %v485
        %1198 = vmatprep.subr.mxu0 %v490
        %1199 = vmatpush1.msra.mxu0 %v489
        %1200 = vmatprep.subr.mxu0 %v494
        %1201 = vmatpush1.msra.mxu0 %v493
        %1202 = vmatprep.subr.mxu0 %v498
        %1203 = vmatpush1.msra.mxu0 %v497
        %1204 = vmatprep.subr.mxu0 %v502
        %1205 = vmatpush1.msra.mxu0 %v501
        %1206 = vmatprep.subr.mxu0 %v506
        %1207 = vmatpush1.msra.mxu0 %v505
        %1208 = vmatprep.subr.mxu0 0.0
        %1209 = vmatpush1.msra.mxu0 0.0
        %1210 = vmatprep.subr.mxu0 0.0
        %1211 = vmatpush1.msra.mxu0 0.0
        %1212 = vmatprep.subr.mxu0 0.0
        %1213 = vmatpush1.msra.mxu0 0.0
        %1214 = vmatprep.subr.mxu0 0.0
        %1215 = vmatpush1.msra.mxu0 0.0
        %1216 = vmatprep.subr.mxu0 0.0
        %1217 = vmatpush1.msra.mxu0 0.0
        %1218 = vmatprep.subr.mxu0 0.0
        %1219 = vmatpush1.msra.mxu0 0.0
        %1220 = vmatprep.subr.mxu0 0.0
        %1221 = vmatpush1.msra.mxu0 0.0
        %1222 = vmatprep.subr.mxu0 0.0
        %1223 = vmatpush1.msra.mxu0 0.0
        %1224 = vmatprep.subr.mxu0 0.0
        %1225 = vmatpush1.msra.mxu0 0.0
        %1226 = vmatprep.subr.mxu0 0.0
        %1227 = vmatpush1.msra.mxu0 0.0
        %1228 = vmatprep.subr.mxu0 0.0
        %1229 = vmatpush1.msra.mxu0 0.0
        %1230 = vmatprep.subr.mxu0 0.0
        %1231 = vmatpush1.msra.mxu0 0.0
        %1232 = vmatprep.subr.mxu0 0.0
        %1233 = vmatpush1.msra.mxu0 0.0
        %1234 = vmatprep.subr.mxu0 0.0
        %1235 = vmatpush1.msra.mxu0 0.0
        %1236 = vmatprep.subr.mxu0 0.0
        %1237 = vmatpush1.msra.mxu0 0.0
        %1238 = vmatprep.subr.mxu0 0.0
        %1239 = vmatpush1.msra.mxu0 0.0
        %1240 = vmatprep.mubr.f32.mxu0 0.0
        %1241 = vmatmul.mubr.f32.gmra.mrb[0].mxu0 %v1103
        %v1242 = vpop.f32.mrb[0].mxu0
        %v1243 = vadd.f32 0.0, %v1242
        %v1244 = vpop.f32.mrb[0].mxu0
        %v1245 = vadd.f32 0.0, %v1244
        %1246 = vdwg.mxu0
        %v1247 = vadd.f32 %v616, %v1172
        %v1248 = vadd.f32 %v618, %v1174
        %v1249 = vadd.f32 %v729, %v1243
        %v1250 = vadd.f32 %v731, %v1245
        %v1251 = vxor.u32 %v1247, 2147483648
        %v1252 = vmul.f32 %v1251, 1.442695
        %v1253 = vpow.pop %v1252
        %v1254 = vadd.f32 %v1253, 1.0
        %v1255 = vrcp.pop %v1254
        %v1256 = vmul.f32 1.0, %v1255
        %v1257 = vxor.u32 %v1248, 2147483648
        %v1258 = vmul.f32 %v1257, 1.442695
        %v1259 = vpow.pop %v1258
        %v1260 = vadd.f32 %v1259, 1.0
        %v1261 = vrcp.pop %v1260
        %v1262 = vmul.f32 1.0, %v1261
        %v1263 = vtanh.pop %v1249
        %v1264 = vxor.u32 %v1250, 2147483648
        %v1265 = vmul.f32 %v1264, 1.442695
        %v1266 = vpow.pop %v1265
        %v1267 = vadd.f32 %v1266, 1.0
        %v1268 = vrcp.pop %v1267
        %v1269 = vmul.f32 1.0, %v1268
        %v1270 = vmul.f32 %v1262, %v1101
        %v1271 = vmul.f32 %v1256, %v1263
        %v1272 = vadd.f32 %v1270, %v1271
        %v1273 = vtanh.pop %v1272
        %v1274 = vmul.f32 %v1269, %v1273
        %1275 = vst [vmem:[#allocation2 + $0x10] sm:$0xff] %v1274
        %1276 = vmatprep.subr.mxu0 %v444
        %1277 = vmatpush1.msra.mxu0 %v443
        %1278 = vmatprep.subr.mxu0 %v448
        %1279 = vmatpush1.msra.mxu0 %v447
        %1280 = vmatprep.subr.mxu0 %v452
        %1281 = vmatpush1.msra.mxu0 %v451
        %1282 = vmatprep.subr.mxu0 %v456
        %1283 = vmatpush1.msra.mxu0 %v455
        %1284 = vmatprep.subr.mxu0 %v460
        %1285 = vmatpush1.msra.mxu0 %v459
        %1286 = vmatprep.subr.mxu0 %v464
        %1287 = vmatpush1.msra.mxu0 %v463
        %1288 = vmatprep.subr.mxu0 %v468
        %1289 = vmatpush1.msra.mxu0 %v467
        %1290 = vmatprep.subr.mxu0 %v472
        %1291 = vmatpush1.msra.mxu0 %v471
        %1292 = vmatprep.subr.mxu0 %v476
        %1293 = vmatpush1.msra.mxu0 %v475
        %1294 = vmatprep.subr.mxu0 %v480
        %1295 = vmatpush1.msra.mxu0 %v479
        %1296 = vmatprep.subr.mxu0 %v484
        %1297 = vmatpush1.msra.mxu0 %v483
        %1298 = vmatprep.subr.mxu0 %v488
        %1299 = vmatpush1.msra.mxu0 %v487
        %1300 = vmatprep.subr.mxu0 %v492
        %1301 = vmatpush1.msra.mxu0 %v491
        %1302 = vmatprep.subr.mxu0 %v496
        %1303 = vmatpush1.msra.mxu0 %v495
        %1304 = vmatprep.subr.mxu0 %v500
        %1305 = vmatpush1.msra.mxu0 %v499
        %1306 = vmatprep.subr.mxu0 %v504
        %1307 = vmatpush1.msra.mxu0 %v503
        %1308 = vmatprep.subr.mxu0 0.0
        %1309 = vmatpush1.msra.mxu0 0.0
        %1310 = vmatprep.subr.mxu0 0.0
        %1311 = vmatpush1.msra.mxu0 0.0
        %1312 = vmatprep.subr.mxu0 0.0
        %1313 = vmatpush1.msra.mxu0 0.0
        %1314 = vmatprep.subr.mxu0 0.0
        %1315 = vmatpush1.msra.mxu0 0.0
        %1316 = vmatprep.subr.mxu0 0.0
        %1317 = vmatpush1.msra.mxu0 0.0
        %1318 = vmatprep.subr.mxu0 0.0
        %1319 = vmatpush1.msra.mxu0 0.0
        %1320 = vmatprep.subr.mxu0 0.0
        %1321 = vmatpush1.msra.mxu0 0.0
        %1322 = vmatprep.subr.mxu0 0.0
        %1323 = vmatpush1.msra.mxu0 0.0
        %1324 = vmatprep.subr.mxu0 0.0
        %1325 = vmatpush1.msra.mxu0 0.0
        %1326 = vmatprep.subr.mxu0 0.0
        %1327 = vmatpush1.msra.mxu0 0.0
        %1328 = vmatprep.subr.mxu0 0.0
        %1329 = vmatpush1.msra.mxu0 0.0
        %1330 = vmatprep.subr.mxu0 0.0
        %1331 = vmatpush1.msra.mxu0 0.0
        %1332 = vmatprep.subr.mxu0 0.0
        %1333 = vmatpush1.msra.mxu0 0.0
        %1334 = vmatprep.subr.mxu0 0.0
        %1335 = vmatpush1.msra.mxu0 0.0
        %1336 = vmatprep.subr.mxu0 0.0
        %1337 = vmatpush1.msra.mxu0 0.0
        %1338 = vmatprep.subr.mxu0 0.0
        %1339 = vmatpush1.msra.mxu0 0.0
        %1340 = vmatprep.mubr.f32.mxu0 0.0
        %1341 = vmatmul.mubr.f32.gmra.mrb[0].mxu0 %v1274
        %v1342 = vpop.f32.mrb[0].mxu0
        %v1343 = vadd.f32 0.0, %v1342
        %v1344 = vpop.f32.mrb[0].mxu0
        %v1345 = vadd.f32 0.0, %v1344
        %1346 = vdwg.mxu0
        %1347 = vmatprep.subr.mxu0 %v446
        %1348 = vmatpush1.msra.mxu0 %v445
        %1349 = vmatprep.subr.mxu0 %v450
        %1350 = vmatpush1.msra.mxu0 %v449
        %1351 = vmatprep.subr.mxu0 %v454
        %1352 = vmatpush1.msra.mxu0 %v453
        %1353 = vmatprep.subr.mxu0 %v458
        %1354 = vmatpush1.msra.mxu0 %v457
        %1355 = vmatprep.subr.mxu0 %v462
        %1356 = vmatpush1.msra.mxu0 %v461
        %1357 = vmatprep.subr.mxu0 %v466
        %1358 = vmatpush1.msra.mxu0 %v465
        %1359 = vmatprep.subr.mxu0 %v470
        %1360 = vmatpush1.msra.mxu0 %v469
        %1361 = vmatprep.subr.mxu0 %v474
        %1362 = vmatpush1.msra.mxu0 %v473
        %1363 = vmatprep.subr.mxu0 %v478
        %1364 = vmatpush1.msra.mxu0 %v477
        %1365 = vmatprep.subr.mxu0 %v482
        %1366 = vmatpush1.msra.mxu0 %v481
        %1367 = vmatprep.subr.mxu0 %v486
        %1368 = vmatpush1.msra.mxu0 %v485
        %1369 = vmatprep.subr.mxu0 %v490
        %1370 = vmatpush1.msra.mxu0 %v489
        %1371 = vmatprep.subr.mxu0 %v494
        %1372 = vmatpush1.msra.mxu0 %v493
        %1373 = vmatprep.subr.mxu0 %v498
        %1374 = vmatpush1.msra.mxu0 %v497
        %1375 = vmatprep.subr.mxu0 %v502
        %1376 = vmatpush1.msra.mxu0 %v501
        %1377 = vmatprep.subr.mxu0 %v506
        %1378 = vmatpush1.msra.mxu0 %v505
        %1379 = vmatprep.subr.mxu0 0.0
        %1380 = vmatpush1.msra.mxu0 0.0
        %1381 = vmatprep.subr.mxu0 0.0
        %1382 = vmatpush1.msra.mxu0 0.0
        %1383 = vmatprep.subr.mxu0 0.0
        %1384 = vmatpush1.msra.mxu0 0.0
        %1385 = vmatprep.subr.mxu0 0.0
        %1386 = vmatpush1.msra.mxu0 0.0
        %1387 = vmatprep.subr.mxu0 0.0
        %1388 = vmatpush1.msra.mxu0 0.0
        %1389 = vmatprep.subr.mxu0 0.0
        %1390 = vmatpush1.msra.mxu0 0.0
        %1391 = vmatprep.subr.mxu0 0.0
        %1392 = vmatpush1.msra.mxu0 0.0
        %1393 = vmatprep.subr.mxu0 0.0
        %1394 = vmatpush1.msra.mxu0 0.0
        %1395 = vmatprep.subr.mxu0 0.0
        %1396 = vmatpush1.msra.mxu0 0.0
        %1397 = vmatprep.subr.mxu0 0.0
        %1398 = vmatpush1.msra.mxu0 0.0
        %1399 = vmatprep.subr.mxu0 0.0
        %1400 = vmatpush1.msra.mxu0 0.0
        %1401 = vmatprep.subr.mxu0 0.0
        %1402 = vmatpush1.msra.mxu0 0.0
        %1403 = vmatprep.subr.mxu0 0.0
        %1404 = vmatpush1.msra.mxu0 0.0
        %1405 = vmatprep.subr.mxu0 0.0
        %1406 = vmatpush1.msra.mxu0 0.0
        %1407 = vmatprep.subr.mxu0 0.0
        %1408 = vmatpush1.msra.mxu0 0.0
        %1409 = vmatprep.subr.mxu0 0.0
        %1410 = vmatpush1.msra.mxu0 0.0
        %1411 = vmatprep.mubr.f32.mxu0 0.0
        %1412 = vmatmul.mubr.f32.gmra.mrb[0].mxu0 %v1274
        %v1413 = vpop.f32.mrb[0].mxu0
        %v1414 = vadd.f32 0.0, %v1413
        %v1415 = vpop.f32.mrb[0].mxu0
        %v1416 = vadd.f32 0.0, %v1415
        %1417 = vdwg.mxu0
        %v1418 = vadd.f32 %v622, %v1343
        %v1419 = vadd.f32 %v624, %v1345
        %v1420 = vadd.f32 %v735, %v1414
        %v1421 = vadd.f32 %v737, %v1416
        %v1422 = vxor.u32 %v1418, 2147483648
        %v1423 = vmul.f32 %v1422, 1.442695
        %v1424 = vpow.pop %v1423
        %v1425 = vadd.f32 %v1424, 1.0
        %v1426 = vrcp.pop %v1425
        %v1427 = vmul.f32 1.0, %v1426
        %v1428 = vxor.u32 %v1419, 2147483648
        %v1429 = vmul.f32 %v1428, 1.442695
        %v1430 = vpow.pop %v1429
        %v1431 = vadd.f32 %v1430, 1.0
        %v1432 = vrcp.pop %v1431
        %v1433 = vmul.f32 1.0, %v1432
        %v1434 = vtanh.pop %v1420
        %v1435 = vxor.u32 %v1421, 2147483648
        %v1436 = vmul.f32 %v1435, 1.442695
        %v1437 = vpow.pop %v1436
        %v1438 = vadd.f32 %v1437, 1.0
        %v1439 = vrcp.pop %v1438
        %v1440 = vmul.f32 1.0, %v1439
        %v1441 = vmul.f32 %v1433, %v1272
        %v1442 = vmul.f32 %v1427, %v1434
        %v1443 = vadd.f32 %v1441, %v1442
        %v1444 = vtanh.pop %v1443
        %v1445 = vmul.f32 %v1440, %v1444
        %1446 = vst [vmem:[#allocation2 + $0x18] sm:$0xff] %v1445
        %1447 = vmatprep.subr.mxu0 %v444
        %1448 = vmatpush1.msra.mxu0 %v443
        %1449 = vmatprep.subr.mxu0 %v448
        %1450 = vmatpush1.msra.mxu0 %v447
        %1451 = vmatprep.subr.mxu0 %v452
        %1452 = vmatpush1.msra.mxu0 %v451
        %1453 = vmatprep.subr.mxu0 %v456
        %1454 = vmatpush1.msra.mxu0 %v455
        %1455 = vmatprep.subr.mxu0 %v460
        %1456 = vmatpush1.msra.mxu0 %v459
        %1457 = vmatprep.subr.mxu0 %v464
        %1458 = vmatpush1.msra.mxu0 %v463
        %1459 = vmatprep.subr.mxu0 %v468
        %1460 = vmatpush1.msra.mxu0 %v467
        %1461 = vmatprep.subr.mxu0 %v472
        %1462 = vmatpush1.msra.mxu0 %v471
        %1463 = vmatprep.subr.mxu0 %v476
        %1464 = vmatpush1.msra.mxu0 %v475
        %1465 = vmatprep.subr.mxu0 %v480
        %1466 = vmatpush1.msra.mxu0 %v479
        %1467 = vmatprep.subr.mxu0 %v484
        %1468 = vmatpush1.msra.mxu0 %v483
        %1469 = vmatprep.subr.mxu0 %v488
        %1470 = vmatpush1.msra.mxu0 %v487
        %1471 = vmatprep.subr.mxu0 %v492
        %1472 = vmatpush1.msra.mxu0 %v491
        %1473 = vmatprep.subr.mxu0 %v496
        %1474 = vmatpush1.msra.mxu0 %v495
        %1475 = vmatprep.subr.mxu0 %v500
        %1476 = vmatpush1.msra.mxu0 %v499
        %1477 = vmatprep.subr.mxu0 %v504
        %1478 = vmatpush1.msra.mxu0 %v503
        %1479 = vmatprep.subr.mxu0 0.0
        %1480 = vmatpush1.msra.mxu0 0.0
        %1481 = vmatprep.subr.mxu0 0.0
        %1482 = vmatpush1.msra.mxu0 0.0
        %1483 = vmatprep.subr.mxu0 0.0
        %1484 = vmatpush1.msra.mxu0 0.0
        %1485 = vmatprep.subr.mxu0 0.0
        %1486 = vmatpush1.msra.mxu0 0.0
        %1487 = vmatprep.subr.mxu0 0.0
        %1488 = vmatpush1.msra.mxu0 0.0
        %1489 = vmatprep.subr.mxu0 0.0
        %1490 = vmatpush1.msra.mxu0 0.0
        %1491 = vmatprep.subr.mxu0 0.0
        %1492 = vmatpush1.msra.mxu0 0.0
        %1493 = vmatprep.subr.mxu0 0.0
        %1494 = vmatpush1.msra.mxu0 0.0
        %1495 = vmatprep.subr.mxu0 0.0
        %1496 = vmatpush1.msra.mxu0 0.0
        %1497 = vmatprep.subr.mxu0 0.0
        %1498 = vmatpush1.msra.mxu0 0.0
        %1499 = vmatprep.subr.mxu0 0.0
        %1500 = vmatpush1.msra.mxu0 0.0
        %1501 = vmatprep.subr.mxu0 0.0
        %1502 = vmatpush1.msra.mxu0 0.0
        %1503 = vmatprep.subr.mxu0 0.0
        %1504 = vmatpush1.msra.mxu0 0.0
        %1505 = vmatprep.subr.mxu0 0.0
        %1506 = vmatpush1.msra.mxu0 0.0
        %1507 = vmatprep.subr.mxu0 0.0
        %1508 = vmatpush1.msra.mxu0 0.0
        %1509 = vmatprep.subr.mxu0 0.0
        %1510 = vmatpush1.msra.mxu0 0.0
        %1511 = vmatprep.mubr.f32.mxu0 0.0
        %1512 = vmatmul.mubr.f32.gmra.mrb[0].mxu0 %v1445
        %v1513 = vpop.f32.mrb[0].mxu0
        %v1514 = vadd.f32 0.0, %v1513
        %v1515 = vpop.f32.mrb[0].mxu0
        %v1516 = vadd.f32 0.0, %v1515
        %1517 = vdwg.mxu0
        %1518 = vmatprep.subr.mxu0 %v446
        %1519 = vmatpush1.msra.mxu0 %v445
        %1520 = vmatprep.subr.mxu0 %v450
        %1521 = vmatpush1.msra.mxu0 %v449
        %1522 = vmatprep.subr.mxu0 %v454
        %1523 = vmatpush1.msra.mxu0 %v453
        %1524 = vmatprep.subr.mxu0 %v458
        %1525 = vmatpush1.msra.mxu0 %v457
        %1526 = vmatprep.subr.mxu0 %v462
        %1527 = vmatpush1.msra.mxu0 %v461
        %1528 = vmatprep.subr.mxu0 %v466
        %1529 = vmatpush1.msra.mxu0 %v465
        %1530 = vmatprep.subr.mxu0 %v470
        %1531 = vmatpush1.msra.mxu0 %v469
        %1532 = vmatprep.subr.mxu0 %v474
        %1533 = vmatpush1.msra.mxu0 %v473
        %1534 = vmatprep.subr.mxu0 %v478
        %1535 = vmatpush1.msra.mxu0 %v477
        %1536 = vmatprep.subr.mxu0 %v482
        %1537 = vmatpush1.msra.mxu0 %v481
        %1538 = vmatprep.subr.mxu0 %v486
        %1539 = vmatpush1.msra.mxu0 %v485
        %1540 = vmatprep.subr.mxu0 %v490
        %1541 = vmatpush1.msra.mxu0 %v489
        %1542 = vmatprep.subr.mxu0 %v494
        %1543 = vmatpush1.msra.mxu0 %v493
        %1544 = vmatprep.subr.mxu0 %v498
        %1545 = vmatpush1.msra.mxu0 %v497
        %1546 = vmatprep.subr.mxu0 %v502
        %1547 = vmatpush1.msra.mxu0 %v501
        %1548 = vmatprep.subr.mxu0 %v506
        %1549 = vmatpush1.msra.mxu0 %v505
        %1550 = vmatprep.subr.mxu0 0.0
        %1551 = vmatpush1.msra.mxu0 0.0
        %1552 = vmatprep.subr.mxu0 0.0
        %1553 = vmatpush1.msra.mxu0 0.0
        %1554 = vmatprep.subr.mxu0 0.0
        %1555 = vmatpush1.msra.mxu0 0.0
        %1556 = vmatprep.subr.mxu0 0.0
        %1557 = vmatpush1.msra.mxu0 0.0
        %1558 = vmatprep.subr.mxu0 0.0
        %1559 = vmatpush1.msra.mxu0 0.0
        %1560 = vmatprep.subr.mxu0 0.0
        %1561 = vmatpush1.msra.mxu0 0.0
        %1562 = vmatprep.subr.mxu0 0.0
        %1563 = vmatpush1.msra.mxu0 0.0
        %1564 = vmatprep.subr.mxu0 0.0
        %1565 = vmatpush1.msra.mxu0 0.0
        %1566 = vmatprep.subr.mxu0 0.0
        %1567 = vmatpush1.msra.mxu0 0.0
        %1568 = vmatprep.subr.mxu0 0.0
        %1569 = vmatpush1.msra.mxu0 0.0
        %1570 = vmatprep.subr.mxu0 0.0
        %1571 = vmatpush1.msra.mxu0 0.0
        %1572 = vmatprep.subr.mxu0 0.0
        %1573 = vmatpush1.msra.mxu0 0.0
        %1574 = vmatprep.subr.mxu0 0.0
        %1575 = vmatpush1.msra.mxu0 0.0
        %1576 = vmatprep.subr.mxu0 0.0
        %1577 = vmatpush1.msra.mxu0 0.0
        %1578 = vmatprep.subr.mxu0 0.0
        %1579 = vmatpush1.msra.mxu0 0.0
        %1580 = vmatprep.subr.mxu0 0.0
        %1581 = vmatpush1.msra.mxu0 0.0
        %1582 = vmatprep.mubr.f32.mxu0 0.0
        %1583 = vmatmul.mubr.f32.gmra.mrb[0].mxu0 %v1445
        %v1584 = vpop.f32.mrb[0].mxu0
        %v1585 = vadd.f32 0.0, %v1584
        %v1586 = vpop.f32.mrb[0].mxu0
        %v1587 = vadd.f32 0.0, %v1586
        %1588 = vdwg.mxu0
        %v1589 = vadd.f32 %v628, %v1514
        %v1590 = vadd.f32 %v630, %v1516
        %v1591 = vadd.f32 %v741, %v1585
        %v1592 = vadd.f32 %v743, %v1587
        %v1593 = vxor.u32 %v1589, 2147483648
        %v1594 = vmul.f32 %v1593, 1.442695
        %v1595 = vpow.pop %v1594
        %v1596 = vadd.f32 %v1595, 1.0
        %v1597 = vrcp.pop %v1596
        %v1598 = vmul.f32 1.0, %v1597
        %v1599 = vxor.u32 %v1590, 2147483648
        %v1600 = vmul.f32 %v1599, 1.442695
        %v1601 = vpow.pop %v1600
        %v1602 = vadd.f32 %v1601, 1.0
        %v1603 = vrcp.pop %v1602
        %v1604 = vmul.f32 1.0, %v1603
        %v1605 = vtanh.pop %v1591
        %v1606 = vxor.u32 %v1592, 2147483648
        %v1607 = vmul.f32 %v1606, 1.442695
        %v1608 = vpow.pop %v1607
        %v1609 = vadd.f32 %v1608, 1.0
        %v1610 = vrcp.pop %v1609
        %v1611 = vmul.f32 1.0, %v1610
        %v1612 = vmul.f32 %v1604, %v1443
        %v1613 = vmul.f32 %v1598, %v1605
        %v1614 = vadd.f32 %v1612, %v1613
        %v1615 = vtanh.pop %v1614
        %v1616 = vmul.f32 %v1611, %v1615
        %1617 = vst [vmem:[#allocation2 + $0x20] sm:$0xff] %v1616
        %1618 = vmatprep.subr.mxu0 %v444
        %1619 = vmatpush1.msra.mxu0 %v443
        %1620 = vmatprep.subr.mxu0 %v448
        %1621 = vmatpush1.msra.mxu0 %v447
        %1622 = vmatprep.subr.mxu0 %v452
        %1623 = vmatpush1.msra.mxu0 %v451
        %1624 = vmatprep.subr.mxu0 %v456
        %1625 = vmatpush1.msra.mxu0 %v455
        %1626 = vmatprep.subr.mxu0 %v460
        %1627 = vmatpush1.msra.mxu0 %v459
        %1628 = vmatprep.subr.mxu0 %v464
        %1629 = vmatpush1.msra.mxu0 %v463
        %1630 = vmatprep.subr.mxu0 %v468
        %1631 = vmatpush1.msra.mxu0 %v467
        %1632 = vmatprep.subr.mxu0 %v472
        %1633 = vmatpush1.msra.mxu0 %v471
        %1634 = vmatprep.subr.mxu0 %v476
        %1635 = vmatpush1.msra.mxu0 %v475
        %1636 = vmatprep.subr.mxu0 %v480
        %1637 = vmatpush1.msra.mxu0 %v479
        %1638 = vmatprep.subr.mxu0 %v484
        %1639 = vmatpush1.msra.mxu0 %v483
        %1640 = vmatprep.subr.mxu0 %v488
        %1641 = vmatpush1.msra.mxu0 %v487
        %1642 = vmatprep.subr.mxu0 %v492
        %1643 = vmatpush1.msra.mxu0 %v491
        %1644 = vmatprep.subr.mxu0 %v496
        %1645 = vmatpush1.msra.mxu0 %v495
        %1646 = vmatprep.subr.mxu0 %v500
        %1647 = vmatpush1.msra.mxu0 %v499
        %1648 = vmatprep.subr.mxu0 %v504
        %1649 = vmatpush1.msra.mxu0 %v503
        %1650 = vmatprep.subr.mxu0 0.0
        %1651 = vmatpush1.msra.mxu0 0.0
        %1652 = vmatprep.subr.mxu0 0.0
        %1653 = vmatpush1.msra.mxu0 0.0
        %1654 = vmatprep.subr.mxu0 0.0
        %1655 = vmatpush1.msra.mxu0 0.0
        %1656 = vmatprep.subr.mxu0 0.0
        %1657 = vmatpush1.msra.mxu0 0.0
        %1658 = vmatprep.subr.mxu0 0.0
        %1659 = vmatpush1.msra.mxu0 0.0
        %1660 = vmatprep.subr.mxu0 0.0
        %1661 = vmatpush1.msra.mxu0 0.0
        %1662 = vmatprep.subr.mxu0 0.0
        %1663 = vmatpush1.msra.mxu0 0.0
        %1664 = vmatprep.subr.mxu0 0.0
        %1665 = vmatpush1.msra.mxu0 0.0
        %1666 = vmatprep.subr.mxu0 0.0
        %1667 = vmatpush1.msra.mxu0 0.0
        %1668 = vmatprep.subr.mxu0 0.0
        %1669 = vmatpush1.msra.mxu0 0.0
        %1670 = vmatprep.subr.mxu0 0.0
        %1671 = vmatpush1.msra.mxu0 0.0
        %1672 = vmatprep.subr.mxu0 0.0
        %1673 = vmatpush1.msra.mxu0 0.0
        %1674 = vmatprep.subr.mxu0 0.0
        %1675 = vmatpush1.msra.mxu0 0.0
        %1676 = vmatprep.subr.mxu0 0.0
        %1677 = vmatpush1.msra.mxu0 0.0
        %1678 = vmatprep.subr.mxu0 0.0
        %1679 = vmatpush1.msra.mxu0 0.0
        %1680 = vmatprep.subr.mxu0 0.0
        %1681 = vmatpush1.msra.mxu0 0.0
        %1682 = vmatprep.mubr.f32.mxu0 0.0
        %1683 = vmatmul.mubr.f32.gmra.mrb[0].mxu0 %v1616
        %v1684 = vpop.f32.mrb[0].mxu0
        %v1685 = vadd.f32 0.0, %v1684
        %v1686 = vpop.f32.mrb[0].mxu0
        %v1687 = vadd.f32 0.0, %v1686
        %1688 = vdwg.mxu0
        %1689 = vmatprep.subr.mxu0 %v446
        %1690 = vmatpush1.msra.mxu0 %v445
        %1691 = vmatprep.subr.mxu0 %v450
        %1692 = vmatpush1.msra.mxu0 %v449
        %1693 = vmatprep.subr.mxu0 %v454
        %1694 = vmatpush1.msra.mxu0 %v453
        %1695 = vmatprep.subr.mxu0 %v458
        %1696 = vmatpush1.msra.mxu0 %v457
        %1697 = vmatprep.subr.mxu0 %v462
        %1698 = vmatpush1.msra.mxu0 %v461
        %1699 = vmatprep.subr.mxu0 %v466
        %1700 = vmatpush1.msra.mxu0 %v465
        %1701 = vmatprep.subr.mxu0 %v470
        %1702 = vmatpush1.msra.mxu0 %v469
        %1703 = vmatprep.subr.mxu0 %v474
        %1704 = vmatpush1.msra.mxu0 %v473
        %1705 = vmatprep.subr.mxu0 %v478
        %1706 = vmatpush1.msra.mxu0 %v477
        %1707 = vmatprep.subr.mxu0 %v482
        %1708 = vmatpush1.msra.mxu0 %v481
        %1709 = vmatprep.subr.mxu0 %v486
        %1710 = vmatpush1.msra.mxu0 %v485
        %1711 = vmatprep.subr.mxu0 %v490
        %1712 = vmatpush1.msra.mxu0 %v489
        %1713 = vmatprep.subr.mxu0 %v494
        %1714 = vmatpush1.msra.mxu0 %v493
        %1715 = vmatprep.subr.mxu0 %v498
        %1716 = vmatpush1.msra.mxu0 %v497
        %1717 = vmatprep.subr.mxu0 %v502
        %1718 = vmatpush1.msra.mxu0 %v501
        %1719 = vmatprep.subr.mxu0 %v506
        %1720 = vmatpush1.msra.mxu0 %v505
        %1721 = vmatprep.subr.mxu0 0.0
        %1722 = vmatpush1.msra.mxu0 0.0
        %1723 = vmatprep.subr.mxu0 0.0
        %1724 = vmatpush1.msra.mxu0 0.0
        %1725 = vmatprep.subr.mxu0 0.0
        %1726 = vmatpush1.msra.mxu0 0.0
        %1727 = vmatprep.subr.mxu0 0.0
        %1728 = vmatpush1.msra.mxu0 0.0
        %1729 = vmatprep.subr.mxu0 0.0
        %1730 = vmatpush1.msra.mxu0 0.0
        %1731 = vmatprep.subr.mxu0 0.0
        %1732 = vmatpush1.msra.mxu0 0.0
        %1733 = vmatprep.subr.mxu0 0.0
        %1734 = vmatpush1.msra.mxu0 0.0
        %1735 = vmatprep.subr.mxu0 0.0
        %1736 = vmatpush1.msra.mxu0 0.0
        %1737 = vmatprep.subr.mxu0 0.0
        %1738 = vmatpush1.msra.mxu0 0.0
        %1739 = vmatprep.subr.mxu0 0.0
        %1740 = vmatpush1.msra.mxu0 0.0
        %1741 = vmatprep.subr.mxu0 0.0
        %1742 = vmatpush1.msra.mxu0 0.0
        %1743 = vmatprep.subr.mxu0 0.0
        %1744 = vmatpush1.msra.mxu0 0.0
        %1745 = vmatprep.subr.mxu0 0.0
        %1746 = vmatpush1.msra.mxu0 0.0
        %1747 = vmatprep.subr.mxu0 0.0
        %1748 = vmatpush1.msra.mxu0 0.0
        %1749 = vmatprep.subr.mxu0 0.0
        %1750 = vmatpush1.msra.mxu0 0.0
        %1751 = vmatprep.subr.mxu0 0.0
        %1752 = vmatpush1.msra.mxu0 0.0
        %1753 = vmatprep.mubr.f32.mxu0 0.0
        %1754 = vmatmul.mubr.f32.gmra.mrb[0].mxu0 %v1616
        %v1755 = vpop.f32.mrb[0].mxu0
        %v1756 = vadd.f32 0.0, %v1755
        %v1757 = vpop.f32.mrb[0].mxu0
        %v1758 = vadd.f32 0.0, %v1757
        %1759 = vdwg.mxu0
        %v1760 = vadd.f32 %v634, %v1685
        %v1761 = vadd.f32 %v636, %v1687
        %v1762 = vadd.f32 %v747, %v1756
        %v1763 = vadd.f32 %v749, %v1758
        %v1764 = vxor.u32 %v1760, 2147483648
        %v1765 = vmul.f32 %v1764, 1.442695
        %v1766 = vpow.pop %v1765
        %v1767 = vadd.f32 %v1766, 1.0
        %v1768 = vrcp.pop %v1767
        %v1769 = vmul.f32 1.0, %v1768
        %v1770 = vxor.u32 %v1761, 2147483648
        %v1771 = vmul.f32 %v1770, 1.442695
        %v1772 = vpow.pop %v1771
        %v1773 = vadd.f32 %v1772, 1.0
        %v1774 = vrcp.pop %v1773
        %v1775 = vmul.f32 1.0, %v1774
        %v1776 = vtanh.pop %v1762
        %v1777 = vxor.u32 %v1763, 2147483648
        %v1778 = vmul.f32 %v1777, 1.442695
        %v1779 = vpow.pop %v1778
        %v1780 = vadd.f32 %v1779, 1.0
        %v1781 = vrcp.pop %v1780
        %v1782 = vmul.f32 1.0, %v1781
        %v1783 = vmul.f32 %v1775, %v1614
        %v1784 = vmul.f32 %v1769, %v1776
        %v1785 = vadd.f32 %v1783, %v1784
        %v1786 = vtanh.pop %v1785
        %v1787 = vmul.f32 %v1782, %v1786
        %1788 = vst [vmem:[#allocation2 + $0x28] sm:$0xff] %v1787
        %1789 = vmatprep.subr.mxu0 %v444
        %1790 = vmatpush1.msra.mxu0 %v443
        %1791 = vmatprep.subr.mxu0 %v448
        %1792 = vmatpush1.msra.mxu0 %v447
        %1793 = vmatprep.subr.mxu0 %v452
        %1794 = vmatpush1.msra.mxu0 %v451
        %1795 = vmatprep.subr.mxu0 %v456
        %1796 = vmatpush1.msra.mxu0 %v455
        %1797 = vmatprep.subr.mxu0 %v460
        %1798 = vmatpush1.msra.mxu0 %v459
        %1799 = vmatprep.subr.mxu0 %v464
        %1800 = vmatpush1.msra.mxu0 %v463
        %1801 = vmatprep.subr.mxu0 %v468
        %1802 = vmatpush1.msra.mxu0 %v467
        %1803 = vmatprep.subr.mxu0 %v472
        %1804 = vmatpush1.msra.mxu0 %v471
        %1805 = vmatprep.subr.mxu0 %v476
        %1806 = vmatpush1.msra.mxu0 %v475
        %1807 = vmatprep.subr.mxu0 %v480
        %1808 = vmatpush1.msra.mxu0 %v479
        %1809 = vmatprep.subr.mxu0 %v484
        %1810 = vmatpush1.msra.mxu0 %v483
        %1811 = vmatprep.subr.mxu0 %v488
        %1812 = vmatpush1.msra.mxu0 %v487
        %1813 = vmatprep.subr.mxu0 %v492
        %1814 = vmatpush1.msra.mxu0 %v491
        %1815 = vmatprep.subr.mxu0 %v496
        %1816 = vmatpush1.msra.mxu0 %v495
        %1817 = vmatprep.subr.mxu0 %v500
        %1818 = vmatpush1.msra.mxu0 %v499
        %1819 = vmatprep.subr.mxu0 %v504
        %1820 = vmatpush1.msra.mxu0 %v503
        %1821 = vmatprep.subr.mxu0 0.0
        %1822 = vmatpush1.msra.mxu0 0.0
        %1823 = vmatprep.subr.mxu0 0.0
        %1824 = vmatpush1.msra.mxu0 0.0
        %1825 = vmatprep.subr.mxu0 0.0
        %1826 = vmatpush1.msra.mxu0 0.0
        %1827 = vmatprep.subr.mxu0 0.0
        %1828 = vmatpush1.msra.mxu0 0.0
        %1829 = vmatprep.subr.mxu0 0.0
        %1830 = vmatpush1.msra.mxu0 0.0
        %1831 = vmatprep.subr.mxu0 0.0
        %1832 = vmatpush1.msra.mxu0 0.0
        %1833 = vmatprep.subr.mxu0 0.0
        %1834 = vmatpush1.msra.mxu0 0.0
        %1835 = vmatprep.subr.mxu0 0.0
        %1836 = vmatpush1.msra.mxu0 0.0
        %1837 = vmatprep.subr.mxu0 0.0
        %1838 = vmatpush1.msra.mxu0 0.0
        %1839 = vmatprep.subr.mxu0 0.0
        %1840 = vmatpush1.msra.mxu0 0.0
        %1841 = vmatprep.subr.mxu0 0.0
        %1842 = vmatpush1.msra.mxu0 0.0
        %1843 = vmatprep.subr.mxu0 0.0
        %1844 = vmatpush1.msra.mxu0 0.0
        %1845 = vmatprep.subr.mxu0 0.0
        %1846 = vmatpush1.msra.mxu0 0.0
        %1847 = vmatprep.subr.mxu0 0.0
        %1848 = vmatpush1.msra.mxu0 0.0
        %1849 = vmatprep.subr.mxu0 0.0
        %1850 = vmatpush1.msra.mxu0 0.0
        %1851 = vmatprep.subr.mxu0 0.0
        %1852 = vmatpush1.msra.mxu0 0.0
        %1853 = vmatprep.mubr.f32.mxu0 0.0
        %1854 = vmatmul.mubr.f32.gmra.mrb[0].mxu0 %v1787
        %v1855 = vpop.f32.mrb[0].mxu0
        %v1856 = vadd.f32 0.0, %v1855
        %v1857 = vpop.f32.mrb[0].mxu0
        %v1858 = vadd.f32 0.0, %v1857
        %1859 = vdwg.mxu0
        %1860 = vmatprep.subr.mxu0 %v446
        %1861 = vmatpush1.msra.mxu0 %v445
        %1862 = vmatprep.subr.mxu0 %v450
        %1863 = vmatpush1.msra.mxu0 %v449
        %1864 = vmatprep.subr.mxu0 %v454
        %1865 = vmatpush1.msra.mxu0 %v453
        %1866 = vmatprep.subr.mxu0 %v458
        %1867 = vmatpush1.msra.mxu0 %v457
        %1868 = vmatprep.subr.mxu0 %v462
        %1869 = vmatpush1.msra.mxu0 %v461
        %1870 = vmatprep.subr.mxu0 %v466
        %1871 = vmatpush1.msra.mxu0 %v465
        %1872 = vmatprep.subr.mxu0 %v470
        %1873 = vmatpush1.msra.mxu0 %v469
        %1874 = vmatprep.subr.mxu0 %v474
        %1875 = vmatpush1.msra.mxu0 %v473
        %1876 = vmatprep.subr.mxu0 %v478
        %1877 = vmatpush1.msra.mxu0 %v477
        %1878 = vmatprep.subr.mxu0 %v482
        %1879 = vmatpush1.msra.mxu0 %v481
        %1880 = vmatprep.subr.mxu0 %v486
        %1881 = vmatpush1.msra.mxu0 %v485
        %1882 = vmatprep.subr.mxu0 %v490
        %1883 = vmatpush1.msra.mxu0 %v489
        %1884 = vmatprep.subr.mxu0 %v494
        %1885 = vmatpush1.msra.mxu0 %v493
        %1886 = vmatprep.subr.mxu0 %v498
        %1887 = vmatpush1.msra.mxu0 %v497
        %1888 = vmatprep.subr.mxu0 %v502
        %1889 = vmatpush1.msra.mxu0 %v501
        %1890 = vmatprep.subr.mxu0 %v506
        %1891 = vmatpush1.msra.mxu0 %v505
        %1892 = vmatprep.subr.mxu0 0.0
        %1893 = vmatpush1.msra.mxu0 0.0
        %1894 = vmatprep.subr.mxu0 0.0
        %1895 = vmatpush1.msra.mxu0 0.0
        %1896 = vmatprep.subr.mxu0 0.0
        %1897 = vmatpush1.msra.mxu0 0.0
        %1898 = vmatprep.subr.mxu0 0.0
        %1899 = vmatpush1.msra.mxu0 0.0
        %1900 = vmatprep.subr.mxu0 0.0
        %1901 = vmatpush1.msra.mxu0 0.0
        %1902 = vmatprep.subr.mxu0 0.0
        %1903 = vmatpush1.msra.mxu0 0.0
        %1904 = vmatprep.subr.mxu0 0.0
        %1905 = vmatpush1.msra.mxu0 0.0
        %1906 = vmatprep.subr.mxu0 0.0
        %1907 = vmatpush1.msra.mxu0 0.0
        %1908 = vmatprep.subr.mxu0 0.0
        %1909 = vmatpush1.msra.mxu0 0.0
        %1910 = vmatprep.subr.mxu0 0.0
        %1911 = vmatpush1.msra.mxu0 0.0
        %1912 = vmatprep.subr.mxu0 0.0
        %1913 = vmatpush1.msra.mxu0 0.0
        %1914 = vmatprep.subr.mxu0 0.0
        %1915 = vmatpush1.msra.mxu0 0.0
        %1916 = vmatprep.subr.mxu0 0.0
        %1917 = vmatpush1.msra.mxu0 0.0
        %1918 = vmatprep.subr.mxu0 0.0
        %1919 = vmatpush1.msra.mxu0 0.0
        %1920 = vmatprep.subr.mxu0 0.0
        %1921 = vmatpush1.msra.mxu0 0.0
        %1922 = vmatprep.subr.mxu0 0.0
        %1923 = vmatpush1.msra.mxu0 0.0
        %1924 = vmatprep.mubr.f32.mxu0 0.0
        %1925 = vmatmul.mubr.f32.gmra.mrb[0].mxu0 %v1787
        %v1926 = vpop.f32.mrb[0].mxu0
        %v1927 = vadd.f32 0.0, %v1926
        %v1928 = vpop.f32.mrb[0].mxu0
        %v1929 = vadd.f32 0.0, %v1928
        %1930 = vdwg.mxu0
        %v1931 = vadd.f32 %v640, %v1856
        %v1932 = vadd.f32 %v642, %v1858
        %v1933 = vadd.f32 %v753, %v1927
        %v1934 = vadd.f32 %v755, %v1929
        %v1935 = vxor.u32 %v1931, 2147483648
        %v1936 = vmul.f32 %v1935, 1.442695
        %v1937 = vpow.pop %v1936
        %v1938 = vadd.f32 %v1937, 1.0
        %v1939 = vrcp.pop %v1938
        %v1940 = vmul.f32 1.0, %v1939
        %v1941 = vxor.u32 %v1932, 2147483648
        %v1942 = vmul.f32 %v1941, 1.442695
        %v1943 = vpow.pop %v1942
        %v1944 = vadd.f32 %v1943, 1.0
        %v1945 = vrcp.pop %v1944
        %v1946 = vmul.f32 1.0, %v1945
        %v1947 = vtanh.pop %v1933
        %v1948 = vxor.u32 %v1934, 2147483648
        %v1949 = vmul.f32 %v1948, 1.442695
        %v1950 = vpow.pop %v1949
        %v1951 = vadd.f32 %v1950, 1.0
        %v1952 = vrcp.pop %v1951
        %v1953 = vmul.f32 1.0, %v1952
        %v1954 = vmul.f32 %v1946, %v1785
        %v1955 = vmul.f32 %v1940, %v1947
        %v1956 = vadd.f32 %v1954, %v1955
        %v1957 = vtanh.pop %v1956
        %v1958 = vmul.f32 %v1953, %v1957
        %1959 = vst [vmem:[#allocation2 + $0x30] sm:$0xff] %v1958
        %1960 = vmatprep.subr.mxu0 %v444
        %1961 = vmatpush1.msra.mxu0 %v443
        %1962 = vmatprep.subr.mxu0 %v448
        %1963 = vmatpush1.msra.mxu0 %v447
        %1964 = vmatprep.subr.mxu0 %v452
        %1965 = vmatpush1.msra.mxu0 %v451
        %1966 = vmatprep.subr.mxu0 %v456
        %1967 = vmatpush1.msra.mxu0 %v455
        %1968 = vmatprep.subr.mxu0 %v460
        %1969 = vmatpush1.msra.mxu0 %v459
        %1970 = vmatprep.subr.mxu0 %v464
        %1971 = vmatpush1.msra.mxu0 %v463
        %1972 = vmatprep.subr.mxu0 %v468
        %1973 = vmatpush1.msra.mxu0 %v467
        %1974 = vmatprep.subr.mxu0 %v472
        %1975 = vmatpush1.msra.mxu0 %v471
        %1976 = vmatprep.subr.mxu0 %v476
        %1977 = vmatpush1.msra.mxu0 %v475
        %1978 = vmatprep.subr.mxu0 %v480
        %1979 = vmatpush1.msra.mxu0 %v479
        %1980 = vmatprep.subr.mxu0 %v484
        %1981 = vmatpush1.msra.mxu0 %v483
        %1982 = vmatprep.subr.mxu0 %v488
        %1983 = vmatpush1.msra.mxu0 %v487
        %1984 = vmatprep.subr.mxu0 %v492
        %1985 = vmatpush1.msra.mxu0 %v491
        %1986 = vmatprep.subr.mxu0 %v496
        %1987 = vmatpush1.msra.mxu0 %v495
        %1988 = vmatprep.subr.mxu0 %v500
        %1989 = vmatpush1.msra.mxu0 %v499
        %1990 = vmatprep.subr.mxu0 %v504
        %1991 = vmatpush1.msra.mxu0 %v503
        %1992 = vmatprep.subr.mxu0 0.0
        %1993 = vmatpush1.msra.mxu0 0.0
        %1994 = vmatprep.subr.mxu0 0.0
        %1995 = vmatpush1.msra.mxu0 0.0
        %1996 = vmatprep.subr.mxu0 0.0
        %1997 = vmatpush1.msra.mxu0 0.0
        %1998 = vmatprep.subr.mxu0 0.0
        %1999 = vmatpush1.msra.mxu0 0.0
        %2000 = vmatprep.subr.mxu0 0.0
        %2001 = vmatpush1.msra.mxu0 0.0
        %2002 = vmatprep.subr.mxu0 0.0
        %2003 = vmatpush1.msra.mxu0 0.0
        %2004 = vmatprep.subr.mxu0 0.0
        %2005 = vmatpush1.msra.mxu0 0.0
        %2006 = vmatprep.subr.mxu0 0.0
        %2007 = vmatpush1.msra.mxu0 0.0
        %2008 = vmatprep.subr.mxu0 0.0
        %2009 = vmatpush1.msra.mxu0 0.0
        %2010 = vmatprep.subr.mxu0 0.0
        %2011 = vmatpush1.msra.mxu0 0.0
        %2012 = vmatprep.subr.mxu0 0.0
        %2013 = vmatpush1.msra.mxu0 0.0
        %2014 = vmatprep.subr.mxu0 0.0
        %2015 = vmatpush1.msra.mxu0 0.0
        %2016 = vmatprep.subr.mxu0 0.0
        %2017 = vmatpush1.msra.mxu0 0.0
        %2018 = vmatprep.subr.mxu0 0.0
        %2019 = vmatpush1.msra.mxu0 0.0
        %2020 = vmatprep.subr.mxu0 0.0
        %2021 = vmatpush1.msra.mxu0 0.0
        %2022 = vmatprep.subr.mxu0 0.0
        %2023 = vmatpush1.msra.mxu0 0.0
        %2024 = vmatprep.mubr.f32.mxu0 0.0
        %2025 = vmatmul.mubr.f32.gmra.mrb[0].mxu0 %v1958
        %v2026 = vpop.f32.mrb[0].mxu0
        %v2027 = vadd.f32 0.0, %v2026
        %v2028 = vpop.f32.mrb[0].mxu0
        %v2029 = vadd.f32 0.0, %v2028
        %2030 = vdwg.mxu0
        %2031 = vmatprep.subr.mxu0 %v446
        %2032 = vmatpush1.msra.mxu0 %v445
        %2033 = vmatprep.subr.mxu0 %v450
        %2034 = vmatpush1.msra.mxu0 %v449
        %2035 = vmatprep.subr.mxu0 %v454
        %2036 = vmatpush1.msra.mxu0 %v453
        %2037 = vmatprep.subr.mxu0 %v458
        %2038 = vmatpush1.msra.mxu0 %v457
        %2039 = vmatprep.subr.mxu0 %v462
        %2040 = vmatpush1.msra.mxu0 %v461
        %2041 = vmatprep.subr.mxu0 %v466
        %2042 = vmatpush1.msra.mxu0 %v465
        %2043 = vmatprep.subr.mxu0 %v470
        %2044 = vmatpush1.msra.mxu0 %v469
        %2045 = vmatprep.subr.mxu0 %v474
        %2046 = vmatpush1.msra.mxu0 %v473
        %2047 = vmatprep.subr.mxu0 %v478
        %2048 = vmatpush1.msra.mxu0 %v477
        %2049 = vmatprep.subr.mxu0 %v482
        %2050 = vmatpush1.msra.mxu0 %v481
        %2051 = vmatprep.subr.mxu0 %v486
        %2052 = vmatpush1.msra.mxu0 %v485
        %2053 = vmatprep.subr.mxu0 %v490
        %2054 = vmatpush1.msra.mxu0 %v489
        %2055 = vmatprep.subr.mxu0 %v494
        %2056 = vmatpush1.msra.mxu0 %v493
        %2057 = vmatprep.subr.mxu0 %v498
        %2058 = vmatpush1.msra.mxu0 %v497
        %2059 = vmatprep.subr.mxu0 %v502
        %2060 = vmatpush1.msra.mxu0 %v501
        %2061 = vmatprep.subr.mxu0 %v506
        %2062 = vmatpush1.msra.mxu0 %v505
        %2063 = vmatprep.subr.mxu0 0.0
        %2064 = vmatpush1.msra.mxu0 0.0
        %2065 = vmatprep.subr.mxu0 0.0
        %2066 = vmatpush1.msra.mxu0 0.0
        %2067 = vmatprep.subr.mxu0 0.0
        %2068 = vmatpush1.msra.mxu0 0.0
        %2069 = vmatprep.subr.mxu0 0.0
        %2070 = vmatpush1.msra.mxu0 0.0
        %2071 = vmatprep.subr.mxu0 0.0
        %2072 = vmatpush1.msra.mxu0 0.0
        %2073 = vmatprep.subr.mxu0 0.0
        %2074 = vmatpush1.msra.mxu0 0.0
        %2075 = vmatprep.subr.mxu0 0.0
        %2076 = vmatpush1.msra.mxu0 0.0
        %2077 = vmatprep.subr.mxu0 0.0
        %2078 = vmatpush1.msra.mxu0 0.0
        %2079 = vmatprep.subr.mxu0 0.0
        %2080 = vmatpush1.msra.mxu0 0.0
        %2081 = vmatprep.subr.mxu0 0.0
        %2082 = vmatpush1.msra.mxu0 0.0
        %2083 = vmatprep.subr.mxu0 0.0
        %2084 = vmatpush1.msra.mxu0 0.0
        %2085 = vmatprep.subr.mxu0 0.0
        %2086 = vmatpush1.msra.mxu0 0.0
        %2087 = vmatprep.subr.mxu0 0.0
        %2088 = vmatpush1.msra.mxu0 0.0
        %2089 = vmatprep.subr.mxu0 0.0
        %2090 = vmatpush1.msra.mxu0 0.0
        %2091 = vmatprep.subr.mxu0 0.0
        %2092 = vmatpush1.msra.mxu0 0.0
        %2093 = vmatprep.subr.mxu0 0.0
        %2094 = vmatpush1.msra.mxu0 0.0
        %2095 = vmatprep.mubr.f32.mxu0 0.0
        %2096 = vmatmul.mubr.f32.gmra.mrb[0].mxu0 %v1958
        %v2097 = vpop.f32.mrb[0].mxu0
        %v2098 = vadd.f32 0.0, %v2097
        %v2099 = vpop.f32.mrb[0].mxu0
        %v2100 = vadd.f32 0.0, %v2099
        %2101 = vdwg.mxu0
        %v2102 = vadd.f32 %v646, %v2027
        %v2103 = vadd.f32 %v648, %v2029
        %v2104 = vadd.f32 %v759, %v2098
        %v2105 = vadd.f32 %v761, %v2100
        %v2106 = vxor.u32 %v2102, 2147483648
        %v2107 = vmul.f32 %v2106, 1.442695
        %v2108 = vpow.pop %v2107
        %v2109 = vadd.f32 %v2108, 1.0
        %v2110 = vrcp.pop %v2109
        %v2111 = vmul.f32 1.0, %v2110
        %v2112 = vxor.u32 %v2103, 2147483648
        %v2113 = vmul.f32 %v2112, 1.442695
        %v2114 = vpow.pop %v2113
        %v2115 = vadd.f32 %v2114, 1.0
        %v2116 = vrcp.pop %v2115
        %v2117 = vmul.f32 1.0, %v2116
        %v2118 = vtanh.pop %v2104
        %v2119 = vxor.u32 %v2105, 2147483648
        %v2120 = vmul.f32 %v2119, 1.442695
        %v2121 = vpow.pop %v2120
        %v2122 = vadd.f32 %v2121, 1.0
        %v2123 = vrcp.pop %v2122
        %v2124 = vmul.f32 1.0, %v2123
        %v2125 = vmul.f32 %v2117, %v1956
        %v2126 = vmul.f32 %v2111, %v2118
        %v2127 = vadd.f32 %v2125, %v2126
        %v2128 = vtanh.pop %v2127
        %v2129 = vmul.f32 %v2124, %v2128
        %2130 = vst [vmem:[#allocation2 + $0x38] sm:$0xff] %v2129
        %p2131 = scmp.eq.s32.totalorder %s24, 9
        // Predicated region
        $region69: #{lstm_model_forward.1} parent=43 // pred_check
          %p2132 = pneg %p2131
        $region70: #{lstm_model_forward.1} parent=43 // pred_check_branch
          %2134 = sbr.rel (%p2132) target = $region72
        $region71: #{lstm_model_forward.1} parent=43 // pred_region
          %v2135 = vld [vmem:[#allocation8] sm:$0xff]
          %v2136 = vld [vmem:[#allocation8 + $0x8] sm:$0xff]
          %v2137 = vld [vmem:[#allocation8 + $0x10] sm:$0xff]
          %v2138 = vld [vmem:[#allocation8 + $0x18] sm:$0xff]
          %v2139 = vld [vmem:[#allocation8 + $0x20] sm:$0xff]
          %v2140 = vld [vmem:[#allocation8 + $0x28] sm:$0xff]
          %v2141 = vld [vmem:[#allocation8 + $0x30] sm:$0xff]
          %v2142 = vld [vmem:[#allocation8 + $0x38] sm:$0xff]
          %v2143 = vld [vmem:[#allocation8 + $0x40] sm:$0xff]
          %v2144 = vld [vmem:[#allocation8 + $0x48] sm:$0xff]
          %v2145 = vld [vmem:[#allocation8 + $0x50] sm:$0xff]
          %v2146 = vld [vmem:[#allocation8 + $0x58] sm:$0xff]
          %v2147 = vld [vmem:[#allocation8 + $0x60] sm:$0xff]
          %v2148 = vld [vmem:[#allocation8 + $0x68] sm:$0xff]
          %v2149 = vld [vmem:[#allocation8 + $0x70] sm:$0xff]
          %v2150 = vld [vmem:[#allocation8 + $0x78] sm:$0xff]
          %v2151 = vld [vmem:[#allocation10] sm:$0x1]
          %v2153 = vlaneseq
          %v2154 = vshrl.u32 %v2153, 7
          %v2155 = vsub.s32 0, %v2154
          %v2156 = vrot.slane %v2151, %v2155
          %2158 = vmatprep.subr.mxu0 0.0
          %2159 = vmatpush1.msra.mxu0 %v2135
          %2160 = vmatprep.subr.mxu0 0.0
          %2161 = vmatpush1.msra.mxu0 %v2136
          %2162 = vmatprep.subr.mxu0 0.0
          %2163 = vmatpush1.msra.mxu0 %v2137
          %2164 = vmatprep.subr.mxu0 0.0
          %2165 = vmatpush1.msra.mxu0 %v2138
          %2166 = vmatprep.subr.mxu0 0.0
          %2167 = vmatpush1.msra.mxu0 %v2139
          %2168 = vmatprep.subr.mxu0 0.0
          %2169 = vmatpush1.msra.mxu0 %v2140
          %2170 = vmatprep.subr.mxu0 0.0
          %2171 = vmatpush1.msra.mxu0 %v2141
          %2172 = vmatprep.subr.mxu0 0.0
          %2173 = vmatpush1.msra.mxu0 %v2142
          %2174 = vmatprep.subr.mxu0 0.0
          %2175 = vmatpush1.msra.mxu0 %v2143
          %2176 = vmatprep.subr.mxu0 0.0
          %2177 = vmatpush1.msra.mxu0 %v2144
          %2178 = vmatprep.subr.mxu0 0.0
          %2179 = vmatpush1.msra.mxu0 %v2145
          %2180 = vmatprep.subr.mxu0 0.0
          %2181 = vmatpush1.msra.mxu0 %v2146
          %2182 = vmatprep.subr.mxu0 0.0
          %2183 = vmatpush1.msra.mxu0 %v2147
          %2184 = vmatprep.subr.mxu0 0.0
          %2185 = vmatpush1.msra.mxu0 %v2148
          %2186 = vmatprep.subr.mxu0 0.0
          %2187 = vmatpush1.msra.mxu0 %v2149
          %2188 = vmatprep.subr.mxu0 0.0
          %2189 = vmatpush1.msra.mxu0 %v2150
          %2190 = vmatprep.subr.mxu0 0.0
          %2191 = vmatpush1.msra.mxu0 0.0
          %2192 = vmatprep.subr.mxu0 0.0
          %2193 = vmatpush1.msra.mxu0 0.0
          %2194 = vmatprep.subr.mxu0 0.0
          %2195 = vmatpush1.msra.mxu0 0.0
          %2196 = vmatprep.subr.mxu0 0.0
          %2197 = vmatpush1.msra.mxu0 0.0
          %2198 = vmatprep.subr.mxu0 0.0
          %2199 = vmatpush1.msra.mxu0 0.0
          %2200 = vmatprep.subr.mxu0 0.0
          %2201 = vmatpush1.msra.mxu0 0.0
          %2202 = vmatprep.subr.mxu0 0.0
          %2203 = vmatpush1.msra.mxu0 0.0
          %2204 = vmatprep.subr.mxu0 0.0
          %2205 = vmatpush1.msra.mxu0 0.0
          %2206 = vmatprep.subr.mxu0 0.0
          %2207 = vmatpush1.msra.mxu0 0.0
          %2208 = vmatprep.subr.mxu0 0.0
          %2209 = vmatpush1.msra.mxu0 0.0
          %2210 = vmatprep.subr.mxu0 0.0
          %2211 = vmatpush1.msra.mxu0 0.0
          %2212 = vmatprep.subr.mxu0 0.0
          %2213 = vmatpush1.msra.mxu0 0.0
          %2214 = vmatprep.subr.mxu0 0.0
          %2215 = vmatpush1.msra.mxu0 0.0
          %2216 = vmatprep.subr.mxu0 0.0
          %2217 = vmatpush1.msra.mxu0 0.0
          %2218 = vmatprep.subr.mxu0 0.0
          %2219 = vmatpush1.msra.mxu0 0.0
          %2220 = vmatprep.subr.mxu0 0.0
          %2221 = vmatpush1.msra.mxu0 0.0
          %2222 = vmatprep.mubr.f32.mxu0 0.0
          %2223 = vmatmul.mubr.f32.gmra.mrb[0].mxu0 %v2129
          %v2224 = vpop.f32.mrb[0].mxu0
          %v2225 = vadd.f32 %v2156, %v2224
          %v2226 = vpop.f32.mrb[0].mxu0
          %2227 = vdwg.mxu0
          %2228 = vst [vmem:[%s6] sm:$0xff] %v2225
        $region72: #{lstm_model_forward.1} parent=43 // pred_fallthru
          _
        // Predicated region
        $region73: #{lstm_model_forward.1} parent=43 // pred_check
          %p2229 = pneg %p178
        $region74: #{lstm_model_forward.1} parent=43 // pred_check_branch
          %2231 = sbr.rel (%p2229) target = $region76
        $region75: #{lstm_model_forward.1} parent=43 // pred_region
          _
        $region76: #{lstm_model_forward.1} parent=43 // pred_fallthru
          _
        // Predicated region
        $region77: #{lstm_model_forward.1} parent=43 // pred_check
          %p2232 = pneg %p178
        $region78: #{lstm_model_forward.1} parent=43 // pred_check_branch
          %2234 = sbr.rel (%p2232) target = $region80
        $region79: #{lstm_model_forward.1} parent=43 // pred_region
          _
        $region80: #{lstm_model_forward.1} parent=43 // pred_fallthru
          _
      $region44: #{lstm_model_forward.1} parent=5 // pred_fallthru
        _
      %p2235 = scmp.le.s32.totalorder 2, %s19
      // Predicated region
      $region81: #{lstm_model_forward.1} parent=5 // pred_check
        %p2236 = pneg %p2235
      $region82: #{lstm_model_forward.1} parent=5 // pred_check_branch
        %2238 = sbr.rel (%p2236) target = $region84
      $region83: #{lstm_model_forward.1} parent=5 // pred_region
        %s2239 = ssub.s32 %s19, 2
      $region84: #{lstm_model_forward.1} parent=5 // pred_fallthru
        _
    $region6: #{lstm_model_forward.1} parent=1 // loop_footer
      %s23 = sadd.s32 1, %s19
    $region7: #{lstm_model_forward.1} parent=1 // loop_footer_branch
      %18 = sbr.rel target = $region3
    $region8: #{lstm_model_forward.1} parent=1 // loop_exit
      _
    %2240 = vsyncpa [#allocation4], 1
    %s2241 = scalar_lea.sflag [#allocation4], 1
    %2242 = vsyncpa %s2241, 1
    %2243 = vsyncpa [#allocation6], 1
    %s2244 = scalar_lea.sflag [#allocation6], 1
    %2245 = vsyncpa %s2244, 1
    %2246 = vsyncpa [#allocation9], 1

</llo_original>
